<compile_context>
chip_gen: v7x
topology: tpu7x:2x2x1
jax: 0.10.0
libtpu: 0.0.40
codegen_flags: <defaults>
</compile_context>

<pallas_src>
import functools
import math

import jax
import jax.numpy as jnp
from jax.experimental import pallas as pl
from jax.experimental.pallas import tpu as pltpu


_PARAM_ORDER = ["wq", "bq", "wk", "bk", "wv", "bv", "wo", "bo",
                "g1", "be1", "w1", "b1", "w2", "b2", "g2", "be2"]


def _layernorm(x, gamma, beta, eps=1e-5):
    mean = jnp.mean(x, axis=-1, keepdims=True)
    var = jnp.mean((x - mean) ** 2, axis=-1, keepdims=True)
    return (x - mean) * jax.lax.rsqrt(var + eps) * gamma + beta


def gt_fused_kernel(
    x_ref,
    wq_ref, bq_ref, wk_ref, bk_ref, wv_ref, bv_ref,
    wo_ref, bo_ref,
    g1_ref, be1_ref,
    w1_ref, b1_ref, w2_ref, b2_ref,
    g2_ref, be2_ref,
    out_ref,
    x_carry,
    *, heads: int,
):
    layer = pl.program_id(0)

    # Load the input once; afterwards x lives in the VMEM carry scratch.
    @pl.when(layer == 0)
    def _():
        x_carry[...] = x_ref[...].astype(jnp.float32)

    x = x_carry[...]                                   # [N, D] f32
    n, d = x.shape
    hd = d // heads
    scale = 1.0 / math.sqrt(hd)

    x_mx = x.astype(jnp.bfloat16)                      # MXU operand dtype

    # --- in-projections: y = x @ W + b (weights pre-transposed to [D, D]) ---
    q = jnp.dot(x_mx, wq_ref[...], preferred_element_type=jnp.float32) + bq_ref[...]
    k = jnp.dot(x_mx, wk_ref[...], preferred_element_type=jnp.float32) + bk_ref[...]
    v = jnp.dot(x_mx, wv_ref[...], preferred_element_type=jnp.float32) + bv_ref[...]

    # Fold 1/sqrt(hd) into q (N*hd mults instead of N*N).
    q = q * scale

    # --- heads-batched attention: one contraction per matmul, no concat ---
    qh = jnp.swapaxes(q.reshape(n, heads, hd), 0, 1)   # [H, N, hd]
    kh = jnp.swapaxes(k.reshape(n, heads, hd), 0, 1)   # [H, N, hd]
    vh = jnp.swapaxes(v.reshape(n, heads, hd), 0, 1)   # [H, N, hd]

    s = jnp.einsum("hnd,hmd->hnm",
                   qh.astype(jnp.bfloat16), kh.astype(jnp.bfloat16),
                   preferred_element_type=jnp.float32)        # [H, N, N]
    s = s - jnp.max(s, axis=-1, keepdims=True)
    p = jnp.exp(s)
    denom = jnp.sum(p, axis=-1, keepdims=True)
    p = p * pl.reciprocal(denom, approx=True)                 # EUP, not VALU div

    ctx = jnp.einsum("hnm,hmd->hnd",
                     p.astype(jnp.bfloat16), vh.astype(jnp.bfloat16),
                     preferred_element_type=jnp.float32)      # [H, N, hd]
    attn = jnp.swapaxes(ctx, 0, 1).reshape(n, d)              # [N, D]

    # --- output projection ---
    attn = jnp.dot(attn.astype(jnp.bfloat16), wo_ref[...],
                   preferred_element_type=jnp.float32) + bo_ref[...]

    # --- residual + LayerNorm 1 (f32) ---
    h1 = _layernorm(x + attn, g1_ref[...], be1_ref[...])

    # --- FFN: Linear(D, 4D) -> ReLU -> Linear(4D, D) ---
    f = jnp.dot(h1.astype(jnp.bfloat16), w1_ref[...],
                preferred_element_type=jnp.float32) + b1_ref[...]
    f = jnp.maximum(f, 0.0)
    f = jnp.dot(f.astype(jnp.bfloat16), w2_ref[...],
                preferred_element_type=jnp.float32) + b2_ref[...]

    # --- residual + LayerNorm 2 (f32) ---
    h2 = _layernorm(h1 + f, g2_ref[...], be2_ref[...])

    # Carry for the next layer; out_ref block is resident (same block index
    # every grid step), only the final layer's write reaches HBM.
    x_carry[...] = h2
    out_ref[...] = h2.astype(out_ref.dtype)


def make_stacked_params(key, dim, layers):
    """Per-layer params stacked on a leading [L, ...] axis.

    Weights are bf16 (MXU operands); biases / LayerNorm params are f32.
    Weight layout is [in, out] so the kernel computes y = x @ W + b
    (PyTorch nn.Linear / MultiheadAttention weights must be transposed by
    the caller when loading a real checkpoint).
    """
    s = 0.05
    ks = jax.random.split(key, 8)
    f32, bf16 = jnp.float32, jnp.bfloat16

    def w(k, shape):
        return (jax.random.normal(k, shape, f32) * s).astype(bf16)

    return {
        "wq": w(ks[0], (layers, dim, dim)),
        "wk": w(ks[1], (layers, dim, dim)),
        "wv": w(ks[2], (layers, dim, dim)),
        "wo": w(ks[3], (layers, dim, dim)),
        "bq": jnp.zeros((layers, 1, dim), f32),
        "bk": jnp.zeros((layers, 1, dim), f32),
        "bv": jnp.zeros((layers, 1, dim), f32),
        "bo": jnp.zeros((layers, 1, dim), f32),
        "g1": jnp.ones((layers, 1, dim), f32),
        "be1": jnp.zeros((layers, 1, dim), f32),
        "w1": w(ks[4], (layers, dim, 4 * dim)),
        "b1": jax.random.normal(ks[5], (layers, 1, 4 * dim), f32) * s,
        "w2": w(ks[6], (layers, 4 * dim, dim)),
        "b2": jax.random.normal(ks[7], (layers, 1, dim), f32) * s,
        "g2": jnp.ones((layers, 1, dim), f32),
        "be2": jnp.zeros((layers, 1, dim), f32),
    }


def graph_transformer(node_embeddings, params, heads):
    """PyTorch: x = emb.unsqueeze(0); for layer: x = layer(x); return x.squeeze(0).
    The batch dim of 1 is a no-op; all layers run inside one pallas_call."""
    n, d = node_embeddings.shape
    layers = params["wq"].shape[0]

    tails = {
        "wq": (d, d), "bq": (1, d), "wk": (d, d), "bk": (1, d),
        "wv": (d, d), "bv": (1, d), "wo": (d, d), "bo": (1, d),
        "g1": (1, d), "be1": (1, d),
        "w1": (d, 4 * d), "b1": (1, 4 * d),
        "w2": (4 * d, d), "b2": (1, d),
        "g2": (1, d), "be2": (1, d),
    }

    def stacked_spec(tail):
        zeros = (0,) * len(tail)
        # leading layer dim squeezed out of the kernel ref; index walks l.
        return pl.BlockSpec((None,) + tail, lambda l, _z=zeros: (l,) + _z)

    in_specs = [pl.BlockSpec((n, d), lambda l: (0, 0))]           # x: resident
    in_specs += [stacked_spec(tails[name]) for name in _PARAM_ORDER]

    grid_spec = pltpu.PrefetchScalarGridSpec(
        num_scalar_prefetch=0,
        grid=(layers,),
        in_specs=in_specs,
        out_specs=pl.BlockSpec((n, d), lambda l: (0, 0)),          # resident
        scratch_shapes=[pltpu.VMEM((n, d), jnp.float32)],          # x carry
    )

    return pl.pallas_call(
        functools.partial(gt_fused_kernel, heads=heads),
        out_shape=jax.ShapeDtypeStruct((n, d), node_embeddings.dtype),
        grid_spec=grid_spec,
        compiler_params=pltpu.CompilerParams(
            dimension_semantics=("arbitrary",)),                   # layer dep chain
    )(node_embeddings, *[params[k] for k in _PARAM_ORDER])


if __name__ == "__main__":
    DIM = 32      # embedding dim
    HEADS = 4     # attention heads (DIM % HEADS == 0)
    LAYERS = 2
    N = 8         # number of graph nodes

    root = jax.random.PRNGKey(0)
    kx, kp = jax.random.split(root)

    node_embeddings = jax.random.normal(kx, (N, DIM), jnp.float32)
    params = make_stacked_params(kp, DIM, LAYERS)

    out = graph_transformer(node_embeddings, params, HEADS)
    out = jax.block_until_ready(out)

    assert out.shape == (N, DIM), out.shape
    assert jnp.all(jnp.isfinite(out))
    print("KERNEL_OK")
</pallas_src>

<mosaic_0001>
module attributes {stable_mosaic.version = 11 : i64} {
  func.func @gt_fused_kernel(%arg0: i32, %arg1: memref<8x32xf32, #tpu.memory_space<vmem>>, %arg2: memref<1x32x32xbf16, #tpu.memory_space<vmem>>, %arg3: memref<1x1x32xf32, #tpu.memory_space<vmem>>, %arg4: memref<1x32x32xbf16, #tpu.memory_space<vmem>>, %arg5: memref<1x1x32xf32, #tpu.memory_space<vmem>>, %arg6: memref<1x32x32xbf16, #tpu.memory_space<vmem>>, %arg7: memref<1x1x32xf32, #tpu.memory_space<vmem>>, %arg8: memref<1x32x32xbf16, #tpu.memory_space<vmem>>, %arg9: memref<1x1x32xf32, #tpu.memory_space<vmem>>, %arg10: memref<1x1x32xf32, #tpu.memory_space<vmem>>, %arg11: memref<1x1x32xf32, #tpu.memory_space<vmem>>, %arg12: memref<1x32x128xbf16, #tpu.memory_space<vmem>>, %arg13: memref<1x1x128xf32, #tpu.memory_space<vmem>>, %arg14: memref<1x128x32xbf16, #tpu.memory_space<vmem>>, %arg15: memref<1x1x32xf32, #tpu.memory_space<vmem>>, %arg16: memref<1x1x32xf32, #tpu.memory_space<vmem>>, %arg17: memref<1x1x32xf32, #tpu.memory_space<vmem>>, %arg18: memref<8x32xf32, #tpu.memory_space<vmem>>, %arg19: memref<8x32xf32, #tpu.memory_space<vmem>>) attributes {dimension_semantics = [#tpu.dimension_semantics<arbitrary>], iteration_bounds = array<i64: 2>, scalar_prefetch = 0 : i64, scratch_operands = 1 : i64, tpu.core_type = #tpu.core_type<tc>, window_params = [{pipeline_mode = #tpu.pipeline_mode<synchronous>, transform_indices = @transform_0, window_bounds = array<i64: 8, 32>}, {transform_indices = @transform_1, window_bounds = array<i64: 1, 32, 32>}, {transform_indices = @transform_2, window_bounds = array<i64: 1, 1, 32>}, {transform_indices = @transform_3, window_bounds = array<i64: 1, 32, 32>}, {transform_indices = @transform_4, window_bounds = array<i64: 1, 1, 32>}, {transform_indices = @transform_5, window_bounds = array<i64: 1, 32, 32>}, {transform_indices = @transform_6, window_bounds = array<i64: 1, 1, 32>}, {transform_indices = @transform_7, window_bounds = array<i64: 1, 32, 32>}, {transform_indices = @transform_8, window_bounds = array<i64: 1, 1, 32>}, {transform_indices = @transform_9, window_bounds = array<i64: 1, 1, 32>}, {transform_indices = @transform_10, window_bounds = array<i64: 1, 1, 32>}, {transform_indices = @transform_11, window_bounds = array<i64: 1, 32, 128>}, {transform_indices = @transform_12, window_bounds = array<i64: 1, 1, 128>}, {transform_indices = @transform_13, window_bounds = array<i64: 1, 128, 32>}, {transform_indices = @transform_14, window_bounds = array<i64: 1, 1, 32>}, {transform_indices = @transform_15, window_bounds = array<i64: 1, 1, 32>}, {transform_indices = @transform_16, window_bounds = array<i64: 1, 1, 32>}, {pipeline_mode = #tpu.pipeline_mode<synchronous>, transform_indices = @transform_17, window_bounds = array<i64: 8, 32>}]} {
    %c0_i32 = arith.constant 0 : i32
    %0 = arith.cmpi eq, %arg0, %c0_i32 : i32
    %1 = arith.extui %0 : i1 to i32
    %c0_i32_0 = arith.constant 0 : i32
    %2 = arith.cmpi ne, %1, %c0_i32_0 : i32
    scf.if %2 {
      %c0_75 = arith.constant 0 : index
      %c0_76 = arith.constant 0 : index
      %134 = vector.load %arg1[%c0_75, %c0_76] : memref<8x32xf32, #tpu.memory_space<vmem>>, vector<8x32xf32>
      %c0_77 = arith.constant 0 : index
      %c0_78 = arith.constant 0 : index
      %135 = vector.load %arg19[%c0_77, %c0_78] : memref<8x32xf32, #tpu.memory_space<vmem>>, vector<8x32xf32>
      tpu.vector_store %arg19[%c0_77, %c0_78], %134 {strides = array<i32>} : memref<8x32xf32, #tpu.memory_space<vmem>>, vector<8x32xf32>,
    } else {
    }
    %c0 = arith.constant 0 : index
    %c0_1 = arith.constant 0 : index
    %3 = vector.load %arg19[%c0, %c0_1] : memref<8x32xf32, #tpu.memory_space<vmem>>, vector<8x32xf32>
    %4 = arith.truncf %3 : vector<8x32xf32> to vector<8x32xbf16>
    %c0_2 = arith.constant 0 : index
    %c0_3 = arith.constant 0 : index
    %c0_4 = arith.constant 0 : index
    %5 = vector.load %arg2[%c0_2, %c0_3, %c0_4] : memref<1x32x32xbf16, #tpu.memory_space<vmem>>, vector<1x32x32xbf16>
    %6 = vector.shape_cast %5 : vector<1x32x32xbf16> to vector<32x32xbf16>
    %cst = arith.constant dense<0.000000e+00> : vector<8x32xf32>
    %7 = tpu.matmul %4, %6, %cst {dimension_numbers = #tpu.dot_dimension_numbers<[1], [0], [0], [1], [0, 0, 1, 1], [], []>} : vector<8x32xbf16>, vector<32x32xbf16>, vector<8x32xf32> -> vector<8x32xf32>
    %c0_5 = arith.constant 0 : index
    %c0_6 = arith.constant 0 : index
    %c0_7 = arith.constant 0 : index
    %8 = vector.load %arg3[%c0_5, %c0_6, %c0_7] : memref<1x1x32xf32, #tpu.memory_space<vmem>>, vector<1x1x32xf32>
    %9 = vector.shape_cast %8 : vector<1x1x32xf32> to vector<1x32xf32>
    %10 = vector.broadcast %9 : vector<1x32xf32> to vector<8x32xf32>
    %11 = arith.addf %7, %10 : vector<8x32xf32>
    %c0_8 = arith.constant 0 : index
    %c0_9 = arith.constant 0 : index
    %c0_10 = arith.constant 0 : index
    %12 = vector.load %arg4[%c0_8, %c0_9, %c0_10] : memref<1x32x32xbf16, #tpu.memory_space<vmem>>, vector<1x32x32xbf16>
    %13 = vector.shape_cast %12 : vector<1x32x32xbf16> to vector<32x32xbf16>
    %cst_11 = arith.constant dense<0.000000e+00> : vector<8x32xf32>
    %14 = tpu.matmul %4, %13, %cst_11 {dimension_numbers = #tpu.dot_dimension_numbers<[1], [0], [0], [1], [0, 0, 1, 1], [], []>} : vector<8x32xbf16>, vector<32x32xbf16>, vector<8x32xf32> -> vector<8x32xf32>
    %c0_12 = arith.constant 0 : index
    %c0_13 = arith.constant 0 : index
    %c0_14 = arith.constant 0 : index
    %15 = vector.load %arg5[%c0_12, %c0_13, %c0_14] : memref<1x1x32xf32, #tpu.memory_space<vmem>>, vector<1x1x32xf32>
    %16 = vector.shape_cast %15 : vector<1x1x32xf32> to vector<1x32xf32>
    %17 = vector.broadcast %16 : vector<1x32xf32> to vector<8x32xf32>
    %18 = arith.addf %14, %17 : vector<8x32xf32>
    %c0_15 = arith.constant 0 : index
    %c0_16 = arith.constant 0 : index
    %c0_17 = arith.constant 0 : index
    %19 = vector.load %arg6[%c0_15, %c0_16, %c0_17] : memref<1x32x32xbf16, #tpu.memory_space<vmem>>, vector<1x32x32xbf16>
    %20 = vector.shape_cast %19 : vector<1x32x32xbf16> to vector<32x32xbf16>
    %cst_18 = arith.constant dense<0.000000e+00> : vector<8x32xf32>
    %21 = tpu.matmul %4, %20, %cst_18 {dimension_numbers = #tpu.dot_dimension_numbers<[1], [0], [0], [1], [0, 0, 1, 1], [], []>} : vector<8x32xbf16>, vector<32x32xbf16>, vector<8x32xf32> -> vector<8x32xf32>
    %c0_19 = arith.constant 0 : index
    %c0_20 = arith.constant 0 : index
    %c0_21 = arith.constant 0 : index
    %22 = vector.load %arg7[%c0_19, %c0_20, %c0_21] : memref<1x1x32xf32, #tpu.memory_space<vmem>>, vector<1x1x32xf32>
    %23 = vector.shape_cast %22 : vector<1x1x32xf32> to vector<1x32xf32>
    %24 = vector.broadcast %23 : vector<1x32xf32> to vector<8x32xf32>
    %25 = arith.addf %21, %24 : vector<8x32xf32>
    %cst_22 = arith.constant 0.353553385 : f32
    %26 = vector.broadcast %cst_22 : f32 to vector<8x32xf32>
    %27 = arith.mulf %11, %26 : vector<8x32xf32>
    %28 = vector.shape_cast %27 : vector<8x32xf32> to vector<8x4x8xf32>
    %29 = tpu.transpose %28, [1, 0, 2] : vector<8x4x8xf32> -> vector<4x8x8xf32>
    %30 = vector.shape_cast %18 : vector<8x32xf32> to vector<8x4x8xf32>
    %31 = tpu.transpose %30, [1, 0, 2] : vector<8x4x8xf32> -> vector<4x8x8xf32>
    %32 = vector.shape_cast %25 : vector<8x32xf32> to vector<8x4x8xf32>
    %33 = tpu.transpose %32, [1, 0, 2] : vector<8x4x8xf32> -> vector<4x8x8xf32>
    %34 = arith.truncf %29 : vector<4x8x8xf32> to vector<4x8x8xbf16>
    %35 = arith.truncf %31 : vector<4x8x8xf32> to vector<4x8x8xbf16>
    "tpu.trace_start"() <{level = 10 : i32, message = "hnd,hmd->hnm"}> : () -> ()
    %cst_23 = arith.constant dense<0.000000e+00> : vector<4x8x8xf32>
    %36 = tpu.matmul %34, %35, %cst_23 {dimension_numbers = #tpu.dot_dimension_numbers<[2], [2], [1], [1], [0, 0, 0, 1, 1, 1], [0], [0]>} : vector<4x8x8xbf16>, vector<4x8x8xbf16>, vector<4x8x8xf32> -> vector<4x8x8xf32>
    "tpu.trace_stop"() : () -> ()
    %cst_24 = arith.constant dense<0xFF800000> : vector<4x8xf32>
    %37 = vector.multi_reduction <maximumf>, %36, %cst_24 [2] : vector<4x8x8xf32> to vector<4x8xf32>
    %38 = vector.shape_cast %37 : vector<4x8xf32> to vector<4x8x1xf32>
    %39 = vector.broadcast %38 : vector<4x8x1xf32> to vector<4x8x8xf32>
    %40 = arith.subf %36, %39 : vector<4x8x8xf32>
    %41 = math.exp %40 : vector<4x8x8xf32>
    %cst_25 = arith.constant dense<0.000000e+00> : vector<4x8xf32>
    %42 = vector.multi_reduction <add>, %41, %cst_25 [2] : vector<4x8x8xf32> to vector<4x8xf32>
    %43 = vector.shape_cast %42 : vector<4x8xf32> to vector<4x8x1xf32>
    %44 = tpu.reciprocal %43 {approx = true} : vector<4x8x1xf32> -> vector<4x8x1xf32>
    %45 = vector.broadcast %44 : vector<4x8x1xf32> to vector<4x8x8xf32>
    %46 = arith.mulf %41, %45 : vector<4x8x8xf32>
    %47 = arith.truncf %46 : vector<4x8x8xf32> to vector<4x8x8xbf16>
    %48 = arith.truncf %33 : vector<4x8x8xf32> to vector<4x8x8xbf16>
    "tpu.trace_start"() <{level = 10 : i32, message = "hnm,hmd->hnd"}> : () -> ()
    %cst_26 = arith.constant dense<0.000000e+00> : vector<4x8x8xf32>
    %49 = tpu.matmul %47, %48, %cst_26 {dimension_numbers = #tpu.dot_dimension_numbers<[2], [1], [1], [2], [0, 0, 0, 1, 1, 2], [0], [0]>} : vector<4x8x8xbf16>, vector<4x8x8xbf16>, vector<4x8x8xf32> -> vector<4x8x8xf32>
    "tpu.trace_stop"() : () -> ()
    %50 = tpu.transpose %49, [1, 0, 2] : vector<4x8x8xf32> -> vector<8x4x8xf32>
    %51 = vector.shape_cast %50 : vector<8x4x8xf32> to vector<8x32xf32>
    %52 = arith.truncf %51 : vector<8x32xf32> to vector<8x32xbf16>
    %c0_27 = arith.constant 0 : index
    %c0_28 = arith.constant 0 : index
    %c0_29 = arith.constant 0 : index
    %53 = vector.load %arg8[%c0_27, %c0_28, %c0_29] : memref<1x32x32xbf16, #tpu.memory_space<vmem>>, vector<1x32x32xbf16>
    %54 = vector.shape_cast %53 : vector<1x32x32xbf16> to vector<32x32xbf16>
    %cst_30 = arith.constant dense<0.000000e+00> : vector<8x32xf32>
    %55 = tpu.matmul %52, %54, %cst_30 {dimension_numbers = #tpu.dot_dimension_numbers<[1], [0], [0], [1], [0, 0, 1, 1], [], []>} : vector<8x32xbf16>, vector<32x32xbf16>, vector<8x32xf32> -> vector<8x32xf32>
    %c0_31 = arith.constant 0 : index
    %c0_32 = arith.constant 0 : index
    %c0_33 = arith.constant 0 : index
    %56 = vector.load %arg9[%c0_31, %c0_32, %c0_33] : memref<1x1x32xf32, #tpu.memory_space<vmem>>, vector<1x1x32xf32>
    %57 = vector.shape_cast %56 : vector<1x1x32xf32> to vector<1x32xf32>
    %58 = vector.broadcast %57 : vector<1x32xf32> to vector<8x32xf32>
    %59 = arith.addf %55, %58 : vector<8x32xf32>
    %60 = arith.addf %3, %59 : vector<8x32xf32>
    %c0_34 = arith.constant 0 : index
    %c0_35 = arith.constant 0 : index
    %c0_36 = arith.constant 0 : index
    %61 = vector.load %arg10[%c0_34, %c0_35, %c0_36] : memref<1x1x32xf32, #tpu.memory_space<vmem>>, vector<1x1x32xf32>
    %62 = vector.shape_cast %61 : vector<1x1x32xf32> to vector<1x32xf32>
    %c0_37 = arith.constant 0 : index
    %c0_38 = arith.constant 0 : index
    %c0_39 = arith.constant 0 : index
    %63 = vector.load %arg11[%c0_37, %c0_38, %c0_39] : memref<1x1x32xf32, #tpu.memory_space<vmem>>, vector<1x1x32xf32>
    %64 = vector.shape_cast %63 : vector<1x1x32xf32> to vector<1x32xf32>
    %cst_40 = arith.constant dense<0.000000e+00> : vector<8xf32>
    %65 = vector.multi_reduction <add>, %60, %cst_40 [1] : vector<8x32xf32> to vector<8xf32>
    %66 = vector.shape_cast %65 : vector<8xf32> to vector<8x1xf32>
    %cst_41 = arith.constant 3.200000e+01 : f32
    %67 = vector.broadcast %cst_41 : f32 to vector<8x1xf32>
    %68 = arith.divf %66, %67 : vector<8x1xf32>
    %69 = vector.broadcast %68 : vector<8x1xf32> to vector<8x32xf32>
    %70 = arith.subf %60, %69 : vector<8x32xf32>
    %71 = arith.mulf %70, %70 : vector<8x32xf32>
    %cst_42 = arith.constant dense<0.000000e+00> : vector<8xf32>
    %72 = vector.multi_reduction <add>, %71, %cst_42 [1] : vector<8x32xf32> to vector<8xf32>
    %73 = vector.shape_cast %72 : vector<8xf32> to vector<8x1xf32>
    %cst_43 = arith.constant 3.200000e+01 : f32
    %74 = vector.broadcast %cst_43 : f32 to vector<8x1xf32>
    %75 = arith.divf %73, %74 : vector<8x1xf32>
    %76 = vector.broadcast %68 : vector<8x1xf32> to vector<8x32xf32>
    %77 = arith.subf %60, %76 : vector<8x32xf32>
    %cst_44 = arith.constant 9.99999974E-6 : f32
    %78 = vector.broadcast %cst_44 : f32 to vector<8x1xf32>
    %79 = arith.addf %75, %78 : vector<8x1xf32>
    %80 = math.rsqrt %79 : vector<8x1xf32>
    %81 = vector.broadcast %80 : vector<8x1xf32> to vector<8x32xf32>
    %82 = arith.mulf %77, %81 : vector<8x32xf32>
    %83 = vector.broadcast %62 : vector<1x32xf32> to vector<8x32xf32>
    %84 = arith.mulf %82, %83 : vector<8x32xf32>
    %85 = vector.broadcast %64 : vector<1x32xf32> to vector<8x32xf32>
    %86 = arith.addf %84, %85 : vector<8x32xf32>
    %87 = arith.truncf %86 : vector<8x32xf32> to vector<8x32xbf16>
    %c0_45 = arith.constant 0 : index
    %c0_46 = arith.constant 0 : index
    %c0_47 = arith.constant 0 : index
    %88 = vector.load %arg12[%c0_45, %c0_46, %c0_47] : memref<1x32x128xbf16, #tpu.memory_space<vmem>>, vector<1x32x128xbf16>
    %89 = vector.shape_cast %88 : vector<1x32x128xbf16> to vector<32x128xbf16>
    %cst_48 = arith.constant dense<0.000000e+00> : vector<8x128xf32>
    %90 = tpu.matmul %87, %89, %cst_48 {dimension_numbers = #tpu.dot_dimension_numbers<[1], [0], [0], [1], [0, 0, 1, 1], [], []>} : vector<8x32xbf16>, vector<32x128xbf16>, vector<8x128xf32> -> vector<8x128xf32>
    %c0_49 = arith.constant 0 : index
    %c0_50 = arith.constant 0 : index
    %c0_51 = arith.constant 0 : index
    %91 = vector.load %arg13[%c0_49, %c0_50, %c0_51] : memref<1x1x128xf32, #tpu.memory_space<vmem>>, vector<1x1x128xf32>
    %92 = vector.shape_cast %91 : vector<1x1x128xf32> to vector<1x128xf32>
    %93 = vector.broadcast %92 : vector<1x128xf32> to vector<8x128xf32>
    %94 = arith.addf %90, %93 : vector<8x128xf32>
    %cst_52 = arith.constant 0.000000e+00 : f32
    %95 = vector.broadcast %cst_52 : f32 to vector<8x128xf32>
    %96 = arith.maximumf %94, %95 : vector<8x128xf32>
    %97 = arith.truncf %96 : vector<8x128xf32> to vector<8x128xbf16>
    %c0_53 = arith.constant 0 : index
    %c0_54 = arith.constant 0 : index
    %c0_55 = arith.constant 0 : index
    %98 = vector.load %arg14[%c0_53, %c0_54, %c0_55] : memref<1x128x32xbf16, #tpu.memory_space<vmem>>, vector<1x128x32xbf16>
    %99 = vector.shape_cast %98 : vector<1x128x32xbf16> to vector<128x32xbf16>
    %cst_56 = arith.constant dense<0.000000e+00> : vector<8x32xf32>
    %100 = tpu.matmul %97, %99, %cst_56 {dimension_numbers = #tpu.dot_dimension_numbers<[1], [0], [0], [1], [0, 0, 1, 1], [], []>} : vector<8x128xbf16>, vector<128x32xbf16>, vector<8x32xf32> -> vector<8x32xf32>
    %c0_57 = arith.constant 0 : index
    %c0_58 = arith.constant 0 : index
    %c0_59 = arith.constant 0 : index
    %101 = vector.load %arg15[%c0_57, %c0_58, %c0_59] : memref<1x1x32xf32, #tpu.memory_space<vmem>>, vector<1x1x32xf32>
    %102 = vector.shape_cast %101 : vector<1x1x32xf32> to vector<1x32xf32>
    %103 = vector.broadcast %102 : vector<1x32xf32> to vector<8x32xf32>
    %104 = arith.addf %100, %103 : vector<8x32xf32>
    %105 = arith.addf %86, %104 : vector<8x32xf32>
    %c0_60 = arith.constant 0 : index
    %c0_61 = arith.constant 0 : index
    %c0_62 = arith.constant 0 : index
    %106 = vector.load %arg16[%c0_60, %c0_61, %c0_62] : memref<1x1x32xf32, #tpu.memory_space<vmem>>, vector<1x1x32xf32>
    %107 = vector.shape_cast %106 : vector<1x1x32xf32> to vector<1x32xf32>
    %c0_63 = arith.constant 0 : index
    %c0_64 = arith.constant 0 : index
    %c0_65 = arith.constant 0 : index
    %108 = vector.load %arg17[%c0_63, %c0_64, %c0_65] : memref<1x1x32xf32, #tpu.memory_space<vmem>>, vector<1x1x32xf32>
    %109 = vector.shape_cast %108 : vector<1x1x32xf32> to vector<1x32xf32>
    %cst_66 = arith.constant dense<0.000000e+00> : vector<8xf32>
    %110 = vector.multi_reduction <add>, %105, %cst_66 [1] : vector<8x32xf32> to vector<8xf32>
    %111 = vector.shape_cast %110 : vector<8xf32> to vector<8x1xf32>
    %cst_67 = arith.constant 3.200000e+01 : f32
    %112 = vector.broadcast %cst_67 : f32 to vector<8x1xf32>
    %113 = arith.divf %111, %112 : vector<8x1xf32>
    %114 = vector.broadcast %113 : vector<8x1xf32> to vector<8x32xf32>
    %115 = arith.subf %105, %114 : vector<8x32xf32>
    %116 = arith.mulf %115, %115 : vector<8x32xf32>
    %cst_68 = arith.constant dense<0.000000e+00> : vector<8xf32>
    %117 = vector.multi_reduction <add>, %116, %cst_68 [1] : vector<8x32xf32> to vector<8xf32>
    %118 = vector.shape_cast %117 : vector<8xf32> to vector<8x1xf32>
    %cst_69 = arith.constant 3.200000e+01 : f32
    %119 = vector.broadcast %cst_69 : f32 to vector<8x1xf32>
    %120 = arith.divf %118, %119 : vector<8x1xf32>
    %121 = vector.broadcast %113 : vector<8x1xf32> to vector<8x32xf32>
    %122 = arith.subf %105, %121 : vector<8x32xf32>
    %cst_70 = arith.constant 9.99999974E-6 : f32
    %123 = vector.broadcast %cst_70 : f32 to vector<8x1xf32>
    %124 = arith.addf %120, %123 : vector<8x1xf32>
    %125 = math.rsqrt %124 : vector<8x1xf32>
    %126 = vector.broadcast %125 : vector<8x1xf32> to vector<8x32xf32>
    %127 = arith.mulf %122, %126 : vector<8x32xf32>
    %128 = vector.broadcast %107 : vector<1x32xf32> to vector<8x32xf32>
    %129 = arith.mulf %127, %128 : vector<8x32xf32>
    %130 = vector.broadcast %109 : vector<1x32xf32> to vector<8x32xf32>
    %131 = arith.addf %129, %130 : vector<8x32xf32>
    %c0_71 = arith.constant 0 : index
    %c0_72 = arith.constant 0 : index
    %132 = vector.load %arg19[%c0_71, %c0_72] : memref<8x32xf32, #tpu.memory_space<vmem>>, vector<8x32xf32>
    tpu.vector_store %arg19[%c0_71, %c0_72], %131 {strides = array<i32>} : memref<8x32xf32, #tpu.memory_space<vmem>>, vector<8x32xf32>,
    %c0_73 = arith.constant 0 : index
    %c0_74 = arith.constant 0 : index
    %133 = vector.load %arg18[%c0_73, %c0_74] : memref<8x32xf32, #tpu.memory_space<vmem>>, vector<8x32xf32>
    tpu.vector_store %arg18[%c0_73, %c0_74], %131 {strides = array<i32>} : memref<8x32xf32, #tpu.memory_space<vmem>>, vector<8x32xf32>,
    return
  }
  func.func @transform_0(%arg0: i32) -> (i32, i32) {
    %c0_i32 = arith.constant 0 : i32
    %c0_i32_0 = arith.constant 0 : i32
    %c0_i32_1 = arith.constant 0 : i32
    return %c0_i32, %c0_i32_0 : i32, i32
  }
  func.func @transform_1(%arg0: i32) -> (i32, i32, i32) {
    %c0_i32 = arith.constant 0 : i32
    %c0_i32_0 = arith.constant 0 : i32
    %c0_i32_1 = arith.constant 0 : i32
    return %arg0, %c0_i32, %c0_i32_0 : i32, i32, i32
  }
  func.func @transform_2(%arg0: i32) -> (i32, i32, i32) {
    %c0_i32 = arith.constant 0 : i32
    %c0_i32_0 = arith.constant 0 : i32
    %c0_i32_1 = arith.constant 0 : i32
    return %arg0, %c0_i32, %c0_i32_0 : i32, i32, i32
  }
  func.func @transform_3(%arg0: i32) -> (i32, i32, i32) {
    %c0_i32 = arith.constant 0 : i32
    %c0_i32_0 = arith.constant 0 : i32
    %c0_i32_1 = arith.constant 0 : i32
    return %arg0, %c0_i32, %c0_i32_0 : i32, i32, i32
  }
  func.func @transform_4(%arg0: i32) -> (i32, i32, i32) {
    %c0_i32 = arith.constant 0 : i32
    %c0_i32_0 = arith.constant 0 : i32
    %c0_i32_1 = arith.constant 0 : i32
    return %arg0, %c0_i32, %c0_i32_0 : i32, i32, i32
  }
  func.func @transform_5(%arg0: i32) -> (i32, i32, i32) {
    %c0_i32 = arith.constant 0 : i32
    %c0_i32_0 = arith.constant 0 : i32
    %c0_i32_1 = arith.constant 0 : i32
    return %arg0, %c0_i32, %c0_i32_0 : i32, i32, i32
  }
  func.func @transform_6(%arg0: i32) -> (i32, i32, i32) {
    %c0_i32 = arith.constant 0 : i32
    %c0_i32_0 = arith.constant 0 : i32
    %c0_i32_1 = arith.constant 0 : i32
    return %arg0, %c0_i32, %c0_i32_0 : i32, i32, i32
  }
  func.func @transform_7(%arg0: i32) -> (i32, i32, i32) {
    %c0_i32 = arith.constant 0 : i32
    %c0_i32_0 = arith.constant 0 : i32
    %c0_i32_1 = arith.constant 0 : i32
    return %arg0, %c0_i32, %c0_i32_0 : i32, i32, i32
  }
  func.func @transform_8(%arg0: i32) -> (i32, i32, i32) {
    %c0_i32 = arith.constant 0 : i32
    %c0_i32_0 = arith.constant 0 : i32
    %c0_i32_1 = arith.constant 0 : i32
    return %arg0, %c0_i32, %c0_i32_0 : i32, i32, i32
  }
  func.func @transform_9(%arg0: i32) -> (i32, i32, i32) {
    %c0_i32 = arith.constant 0 : i32
    %c0_i32_0 = arith.constant 0 : i32
    %c0_i32_1 = arith.constant 0 : i32
    return %arg0, %c0_i32, %c0_i32_0 : i32, i32, i32
  }
  func.func @transform_10(%arg0: i32) -> (i32, i32, i32) {
    %c0_i32 = arith.constant 0 : i32
    %c0_i32_0 = arith.constant 0 : i32
    %c0_i32_1 = arith.constant 0 : i32
    return %arg0, %c0_i32, %c0_i32_0 : i32, i32, i32
  }
  func.func @transform_11(%arg0: i32) -> (i32, i32, i32) {
    %c0_i32 = arith.constant 0 : i32
    %c0_i32_0 = arith.constant 0 : i32
    %c0_i32_1 = arith.constant 0 : i32
    return %arg0, %c0_i32, %c0_i32_0 : i32, i32, i32
  }
  func.func @transform_12(%arg0: i32) -> (i32, i32, i32) {
    %c0_i32 = arith.constant 0 : i32
    %c0_i32_0 = arith.constant 0 : i32
    %c0_i32_1 = arith.constant 0 : i32
    return %arg0, %c0_i32, %c0_i32_0 : i32, i32, i32
  }
  func.func @transform_13(%arg0: i32) -> (i32, i32, i32) {
    %c0_i32 = arith.constant 0 : i32
    %c0_i32_0 = arith.constant 0 : i32
    %c0_i32_1 = arith.constant 0 : i32
    return %arg0, %c0_i32, %c0_i32_0 : i32, i32, i32
  }
  func.func @transform_14(%arg0: i32) -> (i32, i32, i32) {
    %c0_i32 = arith.constant 0 : i32
    %c0_i32_0 = arith.constant 0 : i32
    %c0_i32_1 = arith.constant 0 : i32
    return %arg0, %c0_i32, %c0_i32_0 : i32, i32, i32
  }
  func.func @transform_15(%arg0: i32) -> (i32, i32, i32) {
    %c0_i32 = arith.constant 0 : i32
    %c0_i32_0 = arith.constant 0 : i32
    %c0_i32_1 = arith.constant 0 : i32
    return %arg0, %c0_i32, %c0_i32_0 : i32, i32, i32
  }
  func.func @transform_16(%arg0: i32) -> (i32, i32, i32) {
    %c0_i32 = arith.constant 0 : i32
    %c0_i32_0 = arith.constant 0 : i32
    %c0_i32_1 = arith.constant 0 : i32
    return %arg0, %c0_i32, %c0_i32_0 : i32, i32, i32
  }
  func.func @transform_17(%arg0: i32) -> (i32, i32) {
    %c0_i32 = arith.constant 0 : i32
    %c0_i32_0 = arith.constant 0 : i32
    %c0_i32_1 = arith.constant 0 : i32
    return %c0_i32, %c0_i32_0 : i32, i32
  }
}

</mosaic_0001>

<llo_original>
// kernel: tpu_custom_call.1
$region0: #{tpu_custom_call.1}
  #allocation0 [shape = 'u32[]', space=smem, size = 0x4, offset = 0x4, fixed_abs, tag = 'smem constant byte address 0x4 - core index']
  #allocation1 [shape = 'u32[144,128]{1,0:T(1,128)}', space=vmem, size = 0x12000, scoped, tag = 'internal scratch']
  #allocation2 [shape = 'f32[8,32]{1,0:T(8,128)}', space=vmem, size = 0x1000, scoped, tag = 'scratch operand']
  %s0 = inlined_call_operand.hbm [shape: f32[8,32], index: 0, kind: input, shape index: {}]
  %s1 = inlined_call_operand.vmem [shape: bf16[2,32,32], index: 1, kind: input, shape index: {}]
  %s2 = inlined_call_operand.vmem [shape: f32[2,1,32], index: 2, kind: input, shape index: {}]
  %s3 = inlined_call_operand.vmem [shape: bf16[2,32,32], index: 3, kind: input, shape index: {}]
  %s4 = inlined_call_operand.vmem [shape: f32[2,1,32], index: 4, kind: input, shape index: {}]
  %s5 = inlined_call_operand.vmem [shape: bf16[2,32,32], index: 5, kind: input, shape index: {}]
  %s6 = inlined_call_operand.vmem [shape: f32[2,1,32], index: 6, kind: input, shape index: {}]
  %s7 = inlined_call_operand.vmem [shape: bf16[2,32,32], index: 7, kind: input, shape index: {}]
  %s8 = inlined_call_operand.vmem [shape: f32[2,1,32], index: 8, kind: input, shape index: {}]
  %s9 = inlined_call_operand.vmem [shape: f32[2,1,32], index: 9, kind: input, shape index: {}]
  %s10 = inlined_call_operand.vmem [shape: f32[2,1,32], index: 10, kind: input, shape index: {}]
  %s11 = inlined_call_operand.vmem [shape: bf16[2,32,128], index: 11, kind: input, shape index: {}]
  %s12 = inlined_call_operand.vmem [shape: f32[2,1,128], index: 12, kind: input, shape index: {}]
  %s13 = inlined_call_operand.vmem [shape: bf16[2,128,32], index: 13, kind: input, shape index: {}]
  %s14 = inlined_call_operand.vmem [shape: f32[2,1,32], index: 14, kind: input, shape index: {}]
  %s15 = inlined_call_operand.vmem [shape: f32[2,1,32], index: 15, kind: input, shape index: {}]
  %s16 = inlined_call_operand.vmem [shape: f32[2,1,32], index: 16, kind: input, shape index: {}]
  %s17 = inlined_call_operand.hbm [shape: f32[8,32], index: 17, kind: output, shape index: {}]
  %s18 = sld [smem:[#allocation0]]
  $region109: #{tpu_custom_call.1} parent=0
    _
  %s20 = ssub.s32 1, %s18
  %s21 = scalar_select 0, %s20, %s18
  $region1: #{tpu_custom_call.1} parent=0
    #allocation3 [shape = 'u8[4096]{0}', space=vmem, size = 0x1000, scoped, tag = 'input window, operand 0, single buffered']
    #allocation4 [shape = 's32[2]{0}', space=sflag, size = 0x8, scoped, tag = 'scoped memory for tpu_custom_call.1']
    #allocation5 [shape = 's32[2]{0}', space=sflag, size = 0x8, scoped, tag = 'scoped memory for tpu_custom_call.1']
    #allocation6 [shape = 'u8[4096]{0}', space=vmem, size = 0x1000, scoped, tag = 'output window, operand 0, single buffered']
    %22 = vsyncpa [#allocation4], 0
    %23 = vsyncpa [#allocation5], 0
    loop: start=0, step=1, limit=4
    $region2: #{tpu_custom_call.1} parent=1 // loop_pre_header
      _
    $region3: #{tpu_custom_call.1} parent=1 // loop_header
      %s25 = sphi 0, %s29
      %p26 = scmp.ge.s32.totalorder %s25, 4
      %s33 = sphi 0, %s33
      %s35 = sphi 0, %s33
      %s36 = sphi 0, %s35
      %s50 = sphi 0, %s36
      %s56 = sphi 0, %s58
      %s59 = sphi 0, %s56
      %s60 = sphi 0, %s59
      %s76 = sphi 0, %s60
      %s82 = sphi 0, %s84
      %s85 = sphi 0, %s82
      %s86 = sphi 0, %s85
      %s102 = sphi 0, %s86
      %s108 = sphi 0, %s110
      %s111 = sphi 0, %s108
      %s112 = sphi 0, %s111
      %s128 = sphi 0, %s112
      %s134 = sphi 0, %s136
      %s137 = sphi 0, %s134
      %s138 = sphi 0, %s137
      %s154 = sphi 0, %s138
      %s160 = sphi 0, %s162
      %s163 = sphi 0, %s160
      %s164 = sphi 0, %s163
      %s180 = sphi 0, %s164
      %s186 = sphi 0, %s188
      %s189 = sphi 0, %s186
      %s190 = sphi 0, %s189
      %s206 = sphi 0, %s190
      %s212 = sphi 0, %s214
      %s215 = sphi 0, %s212
      %s216 = sphi 0, %s215
      %s232 = sphi 0, %s216
      %s238 = sphi 0, %s240
      %s241 = sphi 0, %s238
      %s242 = sphi 0, %s241
      %s258 = sphi 0, %s242
      %s264 = sphi 0, %s266
      %s267 = sphi 0, %s264
      %s268 = sphi 0, %s267
      %s284 = sphi 0, %s268
      %s290 = sphi 0, %s292
      %s293 = sphi 0, %s290
      %s294 = sphi 0, %s293
      %s310 = sphi 0, %s294
      %s316 = sphi 0, %s318
      %s319 = sphi 0, %s316
      %s320 = sphi 0, %s319
      %s336 = sphi 0, %s320
      %s342 = sphi 0, %s344
      %s345 = sphi 0, %s342
      %s346 = sphi 0, %s345
      %s362 = sphi 0, %s346
      %s368 = sphi 0, %s370
      %s371 = sphi 0, %s368
      %s372 = sphi 0, %s371
      %s388 = sphi 0, %s372
      %s394 = sphi 0, %s396
      %s397 = sphi 0, %s394
      %s398 = sphi 0, %s397
      %s414 = sphi 0, %s398
      %s420 = sphi 0, %s422
      %s423 = sphi 0, %s420
      %s424 = sphi 0, %s423
      %s440 = sphi 0, %s424
      %s446 = sphi 0, %s448
      %s449 = sphi 0, %s446
      %s450 = sphi 0, %s449
      %s466 = sphi 0, %s450
      %s470 = sphi 0, %s470
      %s472 = sphi 0, %s470
      %s473 = sphi 0, %s472
      %s487 = sphi 0, %s473
    $region4: #{tpu_custom_call.1} parent=1 // loop_header_branch
      %28 = sbr.rel (%p26) target = $region8
    $region5: #{tpu_custom_call.1} parent=1 // loop_body
      %s30 = ssub.s32 %s25, 1
      %s31 = ssub.s32 %s25, 2
      %s32 = sadd.s32 %s25, 1
      %s34 = sadd.s32 %s33, 1
      %p37 = scmp.eq.s32.totalorder %s25, 1
      %p38 = scmp.ne.s32.totalorder %s33, %s35
      %p39 = scmp.eq.s32.totalorder %s25, 0
      %p40 = por %p38, %p39
      %p41 = scmp.ne.s32.totalorder %s33, %s35
      %p42 = scmp.eq.s32.totalorder %s30, 1
      %p43 = por %p41, %p42
      %p44 = scmp.ne.s32.totalorder %s35, %s36
      %p45 = scmp.eq.s32.totalorder %s30, 0
      %p46 = por %p44, %p45
      %p47 = scmp.ne.s32.totalorder %s35, %s36
      %p48 = scmp.eq.s32.totalorder %s31, 1
      %p49 = por %p47, %p48
      %p51 = scmp.ne.s32.totalorder %s36, %s50
      %p52 = scmp.eq.s32.totalorder %s31, 0
      %p53 = por %p51, %p52
      %s54 = ssub.s32 %s25, %s32
      %p55 = scmp.eq.s32.totalorder %s54, 0
      %s57 = sadd.s32 %s56, 1
      %s58 = scalar_select %p55, %s56, %s57
      %p61 = pneg %p55
      %p62 = scmp.eq.s32.totalorder %s25, 1
      %p63 = por %p61, %p62
      %p64 = scmp.ne.s32.totalorder %s56, %s59
      %p65 = scmp.eq.s32.totalorder %s25, 0
      %p66 = por %p64, %p65
      %p67 = scmp.ne.s32.totalorder %s56, %s59
      %p68 = scmp.eq.s32.totalorder %s30, 1
      %p69 = por %p67, %p68
      %p70 = scmp.ne.s32.totalorder %s59, %s60
      %p71 = scmp.eq.s32.totalorder %s30, 0
      %p72 = por %p70, %p71
      %p73 = scmp.ne.s32.totalorder %s59, %s60
      %p74 = scmp.eq.s32.totalorder %s31, 1
      %p75 = por %p73, %p74
      %p77 = scmp.ne.s32.totalorder %s60, %s76
      %p78 = scmp.eq.s32.totalorder %s31, 0
      %p79 = por %p77, %p78
      %s80 = ssub.s32 %s25, %s32
      %p81 = scmp.eq.s32.totalorder %s80, 0
      %s83 = sadd.s32 %s82, 1
      %s84 = scalar_select %p81, %s82, %s83
      %p87 = pneg %p81
      %p88 = scmp.eq.s32.totalorder %s25, 1
      %p89 = por %p87, %p88
      %p90 = scmp.ne.s32.totalorder %s82, %s85
      %p91 = scmp.eq.s32.totalorder %s25, 0
      %p92 = por %p90, %p91
      %p93 = scmp.ne.s32.totalorder %s82, %s85
      %p94 = scmp.eq.s32.totalorder %s30, 1
      %p95 = por %p93, %p94
      %p96 = scmp.ne.s32.totalorder %s85, %s86
      %p97 = scmp.eq.s32.totalorder %s30, 0
      %p98 = por %p96, %p97
      %p99 = scmp.ne.s32.totalorder %s85, %s86
      %p100 = scmp.eq.s32.totalorder %s31, 1
      %p101 = por %p99, %p100
      %p103 = scmp.ne.s32.totalorder %s86, %s102
      %p104 = scmp.eq.s32.totalorder %s31, 0
      %p105 = por %p103, %p104
      %s106 = ssub.s32 %s25, %s32
      %p107 = scmp.eq.s32.totalorder %s106, 0
      %s109 = sadd.s32 %s108, 1
      %s110 = scalar_select %p107, %s108, %s109
      %p113 = pneg %p107
      %p114 = scmp.eq.s32.totalorder %s25, 1
      %p115 = por %p113, %p114
      %p116 = scmp.ne.s32.totalorder %s108, %s111
      %p117 = scmp.eq.s32.totalorder %s25, 0
      %p118 = por %p116, %p117
      %p119 = scmp.ne.s32.totalorder %s108, %s111
      %p120 = scmp.eq.s32.totalorder %s30, 1
      %p121 = por %p119, %p120
      %p122 = scmp.ne.s32.totalorder %s111, %s112
      %p123 = scmp.eq.s32.totalorder %s30, 0
      %p124 = por %p122, %p123
      %p125 = scmp.ne.s32.totalorder %s111, %s112
      %p126 = scmp.eq.s32.totalorder %s31, 1
      %p127 = por %p125, %p126
      %p129 = scmp.ne.s32.totalorder %s112, %s128
      %p130 = scmp.eq.s32.totalorder %s31, 0
      %p131 = por %p129, %p130
      %s132 = ssub.s32 %s25, %s32
      %p133 = scmp.eq.s32.totalorder %s132, 0
      %s135 = sadd.s32 %s134, 1
      %s136 = scalar_select %p133, %s134, %s135
      %p139 = pneg %p133
      %p140 = scmp.eq.s32.totalorder %s25, 1
      %p141 = por %p139, %p140
      %p142 = scmp.ne.s32.totalorder %s134, %s137
      %p143 = scmp.eq.s32.totalorder %s25, 0
      %p144 = por %p142, %p143
      %p145 = scmp.ne.s32.totalorder %s134, %s137
      %p146 = scmp.eq.s32.totalorder %s30, 1
      %p147 = por %p145, %p146
      %p148 = scmp.ne.s32.totalorder %s137, %s138
      %p149 = scmp.eq.s32.totalorder %s30, 0
      %p150 = por %p148, %p149
      %p151 = scmp.ne.s32.totalorder %s137, %s138
      %p152 = scmp.eq.s32.totalorder %s31, 1
      %p153 = por %p151, %p152
      %p155 = scmp.ne.s32.totalorder %s138, %s154
      %p156 = scmp.eq.s32.totalorder %s31, 0
      %p157 = por %p155, %p156
      %s158 = ssub.s32 %s25, %s32
      %p159 = scmp.eq.s32.totalorder %s158, 0
      %s161 = sadd.s32 %s160, 1
      %s162 = scalar_select %p159, %s160, %s161
      %p165 = pneg %p159
      %p166 = scmp.eq.s32.totalorder %s25, 1
      %p167 = por %p165, %p166
      %p168 = scmp.ne.s32.totalorder %s160, %s163
      %p169 = scmp.eq.s32.totalorder %s25, 0
      %p170 = por %p168, %p169
      %p171 = scmp.ne.s32.totalorder %s160, %s163
      %p172 = scmp.eq.s32.totalorder %s30, 1
      %p173 = por %p171, %p172
      %p174 = scmp.ne.s32.totalorder %s163, %s164
      %p175 = scmp.eq.s32.totalorder %s30, 0
      %p176 = por %p174, %p175
      %p177 = scmp.ne.s32.totalorder %s163, %s164
      %p178 = scmp.eq.s32.totalorder %s31, 1
      %p179 = por %p177, %p178
      %p181 = scmp.ne.s32.totalorder %s164, %s180
      %p182 = scmp.eq.s32.totalorder %s31, 0
      %p183 = por %p181, %p182
      %s184 = ssub.s32 %s25, %s32
      %p185 = scmp.eq.s32.totalorder %s184, 0
      %s187 = sadd.s32 %s186, 1
      %s188 = scalar_select %p185, %s186, %s187
      %p191 = pneg %p185
      %p192 = scmp.eq.s32.totalorder %s25, 1
      %p193 = por %p191, %p192
      %p194 = scmp.ne.s32.totalorder %s186, %s189
      %p195 = scmp.eq.s32.totalorder %s25, 0
      %p196 = por %p194, %p195
      %p197 = scmp.ne.s32.totalorder %s186, %s189
      %p198 = scmp.eq.s32.totalorder %s30, 1
      %p199 = por %p197, %p198
      %p200 = scmp.ne.s32.totalorder %s189, %s190
      %p201 = scmp.eq.s32.totalorder %s30, 0
      %p202 = por %p200, %p201
      %p203 = scmp.ne.s32.totalorder %s189, %s190
      %p204 = scmp.eq.s32.totalorder %s31, 1
      %p205 = por %p203, %p204
      %p207 = scmp.ne.s32.totalorder %s190, %s206
      %p208 = scmp.eq.s32.totalorder %s31, 0
      %p209 = por %p207, %p208
      %s210 = ssub.s32 %s25, %s32
      %p211 = scmp.eq.s32.totalorder %s210, 0
      %s213 = sadd.s32 %s212, 1
      %s214 = scalar_select %p211, %s212, %s213
      %p217 = pneg %p211
      %p218 = scmp.eq.s32.totalorder %s25, 1
      %p219 = por %p217, %p218
      %p220 = scmp.ne.s32.totalorder %s212, %s215
      %p221 = scmp.eq.s32.totalorder %s25, 0
      %p222 = por %p220, %p221
      %p223 = scmp.ne.s32.totalorder %s212, %s215
      %p224 = scmp.eq.s32.totalorder %s30, 1
      %p225 = por %p223, %p224
      %p226 = scmp.ne.s32.totalorder %s215, %s216
      %p227 = scmp.eq.s32.totalorder %s30, 0
      %p228 = por %p226, %p227
      %p229 = scmp.ne.s32.totalorder %s215, %s216
      %p230 = scmp.eq.s32.totalorder %s31, 1
      %p231 = por %p229, %p230
      %p233 = scmp.ne.s32.totalorder %s216, %s232
      %p234 = scmp.eq.s32.totalorder %s31, 0
      %p235 = por %p233, %p234
      %s236 = ssub.s32 %s25, %s32
      %p237 = scmp.eq.s32.totalorder %s236, 0
      %s239 = sadd.s32 %s238, 1
      %s240 = scalar_select %p237, %s238, %s239
      %p243 = pneg %p237
      %p244 = scmp.eq.s32.totalorder %s25, 1
      %p245 = por %p243, %p244
      %p246 = scmp.ne.s32.totalorder %s238, %s241
      %p247 = scmp.eq.s32.totalorder %s25, 0
      %p248 = por %p246, %p247
      %p249 = scmp.ne.s32.totalorder %s238, %s241
      %p250 = scmp.eq.s32.totalorder %s30, 1
      %p251 = por %p249, %p250
      %p252 = scmp.ne.s32.totalorder %s241, %s242
      %p253 = scmp.eq.s32.totalorder %s30, 0
      %p254 = por %p252, %p253
      %p255 = scmp.ne.s32.totalorder %s241, %s242
      %p256 = scmp.eq.s32.totalorder %s31, 1
      %p257 = por %p255, %p256
      %p259 = scmp.ne.s32.totalorder %s242, %s258
      %p260 = scmp.eq.s32.totalorder %s31, 0
      %p261 = por %p259, %p260
      %s262 = ssub.s32 %s25, %s32
      %p263 = scmp.eq.s32.totalorder %s262, 0
      %s265 = sadd.s32 %s264, 1
      %s266 = scalar_select %p263, %s264, %s265
      %p269 = pneg %p263
      %p270 = scmp.eq.s32.totalorder %s25, 1
      %p271 = por %p269, %p270
      %p272 = scmp.ne.s32.totalorder %s264, %s267
      %p273 = scmp.eq.s32.totalorder %s25, 0
      %p274 = por %p272, %p273
      %p275 = scmp.ne.s32.totalorder %s264, %s267
      %p276 = scmp.eq.s32.totalorder %s30, 1
      %p277 = por %p275, %p276
      %p278 = scmp.ne.s32.totalorder %s267, %s268
      %p279 = scmp.eq.s32.totalorder %s30, 0
      %p280 = por %p278, %p279
      %p281 = scmp.ne.s32.totalorder %s267, %s268
      %p282 = scmp.eq.s32.totalorder %s31, 1
      %p283 = por %p281, %p282
      %p285 = scmp.ne.s32.totalorder %s268, %s284
      %p286 = scmp.eq.s32.totalorder %s31, 0
      %p287 = por %p285, %p286
      %s288 = ssub.s32 %s25, %s32
      %p289 = scmp.eq.s32.totalorder %s288, 0
      %s291 = sadd.s32 %s290, 1
      %s292 = scalar_select %p289, %s290, %s291
      %p295 = pneg %p289
      %p296 = scmp.eq.s32.totalorder %s25, 1
      %p297 = por %p295, %p296
      %p298 = scmp.ne.s32.totalorder %s290, %s293
      %p299 = scmp.eq.s32.totalorder %s25, 0
      %p300 = por %p298, %p299
      %p301 = scmp.ne.s32.totalorder %s290, %s293
      %p302 = scmp.eq.s32.totalorder %s30, 1
      %p303 = por %p301, %p302
      %p304 = scmp.ne.s32.totalorder %s293, %s294
      %p305 = scmp.eq.s32.totalorder %s30, 0
      %p306 = por %p304, %p305
      %p307 = scmp.ne.s32.totalorder %s293, %s294
      %p308 = scmp.eq.s32.totalorder %s31, 1
      %p309 = por %p307, %p308
      %p311 = scmp.ne.s32.totalorder %s294, %s310
      %p312 = scmp.eq.s32.totalorder %s31, 0
      %p313 = por %p311, %p312
      %s314 = ssub.s32 %s25, %s32
      %p315 = scmp.eq.s32.totalorder %s314, 0
      %s317 = sadd.s32 %s316, 1
      %s318 = scalar_select %p315, %s316, %s317
      %p321 = pneg %p315
      %p322 = scmp.eq.s32.totalorder %s25, 1
      %p323 = por %p321, %p322
      %p324 = scmp.ne.s32.totalorder %s316, %s319
      %p325 = scmp.eq.s32.totalorder %s25, 0
      %p326 = por %p324, %p325
      %p327 = scmp.ne.s32.totalorder %s316, %s319
      %p328 = scmp.eq.s32.totalorder %s30, 1
      %p329 = por %p327, %p328
      %p330 = scmp.ne.s32.totalorder %s319, %s320
      %p331 = scmp.eq.s32.totalorder %s30, 0
      %p332 = por %p330, %p331
      %p333 = scmp.ne.s32.totalorder %s319, %s320
      %p334 = scmp.eq.s32.totalorder %s31, 1
      %p335 = por %p333, %p334
      %p337 = scmp.ne.s32.totalorder %s320, %s336
      %p338 = scmp.eq.s32.totalorder %s31, 0
      %p339 = por %p337, %p338
      %s340 = ssub.s32 %s25, %s32
      %p341 = scmp.eq.s32.totalorder %s340, 0
      %s343 = sadd.s32 %s342, 1
      %s344 = scalar_select %p341, %s342, %s343
      %p347 = pneg %p341
      %p348 = scmp.eq.s32.totalorder %s25, 1
      %p349 = por %p347, %p348
      %p350 = scmp.ne.s32.totalorder %s342, %s345
      %p351 = scmp.eq.s32.totalorder %s25, 0
      %p352 = por %p350, %p351
      %p353 = scmp.ne.s32.totalorder %s342, %s345
      %p354 = scmp.eq.s32.totalorder %s30, 1
      %p355 = por %p353, %p354
      %p356 = scmp.ne.s32.totalorder %s345, %s346
      %p357 = scmp.eq.s32.totalorder %s30, 0
      %p358 = por %p356, %p357
      %p359 = scmp.ne.s32.totalorder %s345, %s346
      %p360 = scmp.eq.s32.totalorder %s31, 1
      %p361 = por %p359, %p360
      %p363 = scmp.ne.s32.totalorder %s346, %s362
      %p364 = scmp.eq.s32.totalorder %s31, 0
      %p365 = por %p363, %p364
      %s366 = ssub.s32 %s25, %s32
      %p367 = scmp.eq.s32.totalorder %s366, 0
      %s369 = sadd.s32 %s368, 1
      %s370 = scalar_select %p367, %s368, %s369
      %p373 = pneg %p367
      %p374 = scmp.eq.s32.totalorder %s25, 1
      %p375 = por %p373, %p374
      %p376 = scmp.ne.s32.totalorder %s368, %s371
      %p377 = scmp.eq.s32.totalorder %s25, 0
      %p378 = por %p376, %p377
      %p379 = scmp.ne.s32.totalorder %s368, %s371
      %p380 = scmp.eq.s32.totalorder %s30, 1
      %p381 = por %p379, %p380
      %p382 = scmp.ne.s32.totalorder %s371, %s372
      %p383 = scmp.eq.s32.totalorder %s30, 0
      %p384 = por %p382, %p383
      %p385 = scmp.ne.s32.totalorder %s371, %s372
      %p386 = scmp.eq.s32.totalorder %s31, 1
      %p387 = por %p385, %p386
      %p389 = scmp.ne.s32.totalorder %s372, %s388
      %p390 = scmp.eq.s32.totalorder %s31, 0
      %p391 = por %p389, %p390
      %s392 = ssub.s32 %s25, %s32
      %p393 = scmp.eq.s32.totalorder %s392, 0
      %s395 = sadd.s32 %s394, 1
      %s396 = scalar_select %p393, %s394, %s395
      %p399 = pneg %p393
      %p400 = scmp.eq.s32.totalorder %s25, 1
      %p401 = por %p399, %p400
      %p402 = scmp.ne.s32.totalorder %s394, %s397
      %p403 = scmp.eq.s32.totalorder %s25, 0
      %p404 = por %p402, %p403
      %p405 = scmp.ne.s32.totalorder %s394, %s397
      %p406 = scmp.eq.s32.totalorder %s30, 1
      %p407 = por %p405, %p406
      %p408 = scmp.ne.s32.totalorder %s397, %s398
      %p409 = scmp.eq.s32.totalorder %s30, 0
      %p410 = por %p408, %p409
      %p411 = scmp.ne.s32.totalorder %s397, %s398
      %p412 = scmp.eq.s32.totalorder %s31, 1
      %p413 = por %p411, %p412
      %p415 = scmp.ne.s32.totalorder %s398, %s414
      %p416 = scmp.eq.s32.totalorder %s31, 0
      %p417 = por %p415, %p416
      %s418 = ssub.s32 %s25, %s32
      %p419 = scmp.eq.s32.totalorder %s418, 0
      %s421 = sadd.s32 %s420, 1
      %s422 = scalar_select %p419, %s420, %s421
      %p425 = pneg %p419
      %p426 = scmp.eq.s32.totalorder %s25, 1
      %p427 = por %p425, %p426
      %p428 = scmp.ne.s32.totalorder %s420, %s423
      %p429 = scmp.eq.s32.totalorder %s25, 0
      %p430 = por %p428, %p429
      %p431 = scmp.ne.s32.totalorder %s420, %s423
      %p432 = scmp.eq.s32.totalorder %s30, 1
      %p433 = por %p431, %p432
      %p434 = scmp.ne.s32.totalorder %s423, %s424
      %p435 = scmp.eq.s32.totalorder %s30, 0
      %p436 = por %p434, %p435
      %p437 = scmp.ne.s32.totalorder %s423, %s424
      %p438 = scmp.eq.s32.totalorder %s31, 1
      %p439 = por %p437, %p438
      %p441 = scmp.ne.s32.totalorder %s424, %s440
      %p442 = scmp.eq.s32.totalorder %s31, 0
      %p443 = por %p441, %p442
      %s444 = ssub.s32 %s25, %s32
      %p445 = scmp.eq.s32.totalorder %s444, 0
      %s447 = sadd.s32 %s446, 1
      %s448 = scalar_select %p445, %s446, %s447
      %p451 = pneg %p445
      %p452 = scmp.eq.s32.totalorder %s25, 1
      %p453 = por %p451, %p452
      %p454 = scmp.ne.s32.totalorder %s446, %s449
      %p455 = scmp.eq.s32.totalorder %s25, 0
      %p456 = por %p454, %p455
      %p457 = scmp.ne.s32.totalorder %s446, %s449
      %p458 = scmp.eq.s32.totalorder %s30, 1
      %p459 = por %p457, %p458
      %p460 = scmp.ne.s32.totalorder %s449, %s450
      %p461 = scmp.eq.s32.totalorder %s30, 0
      %p462 = por %p460, %p461
      %p463 = scmp.ne.s32.totalorder %s449, %s450
      %p464 = scmp.eq.s32.totalorder %s31, 1
      %p465 = por %p463, %p464
      %p467 = scmp.ne.s32.totalorder %s450, %s466
      %p468 = scmp.eq.s32.totalorder %s31, 0
      %p469 = por %p467, %p468
      %s471 = sadd.s32 %s470, 1
      %p474 = scmp.eq.s32.totalorder %s25, 1
      %p475 = scmp.ne.s32.totalorder %s470, %s472
      %p476 = scmp.eq.s32.totalorder %s25, 0
      %p477 = por %p475, %p476
      %p478 = scmp.ne.s32.totalorder %s470, %s472
      %p479 = scmp.eq.s32.totalorder %s30, 1
      %p480 = por %p478, %p479
      %p481 = scmp.ne.s32.totalorder %s472, %s473
      %p482 = scmp.eq.s32.totalorder %s30, 0
      %p483 = por %p481, %p482
      %p484 = scmp.ne.s32.totalorder %s472, %s473
      %p485 = scmp.eq.s32.totalorder %s31, 1
      %p486 = por %p484, %p485
      %p488 = scmp.ne.s32.totalorder %s473, %s487
      %p489 = scmp.eq.s32.totalorder %s31, 0
      %p490 = por %p488, %p489
      %p491 = scmp.le.s32.totalorder 1, %s25
      %p492 = scmp.lt.s32.totalorder %s25, 3
      %p493 = pnand %p491, %p492
      %p494 = pneg %p493
      // Predicated region
      $region9: #{tpu_custom_call.1} parent=5 // pred_check
        _
      $region10: #{tpu_custom_call.1} parent=5 // pred_check_branch
        %496 = sbr.rel (%p493) target = $region12
      $region11: #{tpu_custom_call.1} parent=5 // pred_region
        %s497 = ssub.s32 %s25, 1
        // Predicated region
        $region13: #{tpu_custom_call.1} parent=11 // pred_check
          %p498 = pneg %p46
        $region14: #{tpu_custom_call.1} parent=11 // pred_check_branch
          %500 = sbr.rel (%p498) target = $region16
        $region15: #{tpu_custom_call.1} parent=11 // pred_region
          %s502 = ssub.s32 128, 128
          %503 = vsyncadd [#allocation4], %s502
          %s505 = sshll.u32 [#allocation3], 4
          %s506 = int_to_ptr.vmem [resolvable:$true] %s505
          %508 = dma.hbm_to_vmem [thread:$0]  %s0, 128, %s506, [#allocation4]
        $region16: #{tpu_custom_call.1} parent=11 // pred_fallthru
          _
      $region12: #{tpu_custom_call.1} parent=5 // pred_fallthru
        _
      %p509 = scmp.lt.s32.totalorder %s25, 2
      // Predicated region
      $region17: #{tpu_custom_call.1} parent=5 // pred_check
        %p510 = pneg %p509
      $region18: #{tpu_custom_call.1} parent=5 // pred_check_branch
        %512 = sbr.rel (%p510) target = $region20
      $region19: #{tpu_custom_call.1} parent=5 // pred_region
        // Predicated region
        $region21: #{tpu_custom_call.1} parent=19 // pred_check
          %p513 = pneg %p66
        $region22: #{tpu_custom_call.1} parent=19 // pred_check_branch
          %515 = sbr.rel (%p513) target = $region24
        $region23: #{tpu_custom_call.1} parent=19 // pred_region
          %p516 = scmp.lt.s32.totalorder %s25, 1
          %s517 = scalar_select %p516, %s25, 1
          %s518 = smul.addr %s517, 4
          %s519 = smul.addr %s518, 4
          %s520 = scalar_lea.vmem %s1, %s519
        $region24: #{tpu_custom_call.1} parent=19 // pred_fallthru
          _
        // Predicated region
        $region25: #{tpu_custom_call.1} parent=19 // pred_check
          %p521 = pneg %p92
        $region26: #{tpu_custom_call.1} parent=19 // pred_check_branch
          %523 = sbr.rel (%p521) target = $region28
        $region27: #{tpu_custom_call.1} parent=19 // pred_region
          %p524 = scmp.lt.s32.totalorder %s25, 1
          %s525 = scalar_select %p524, %s25, 1
          %s526 = scalar_lea.vmem %s2, %s525
        $region28: #{tpu_custom_call.1} parent=19 // pred_fallthru
          _
        // Predicated region
        $region29: #{tpu_custom_call.1} parent=19 // pred_check
          %p527 = pneg %p118
        $region30: #{tpu_custom_call.1} parent=19 // pred_check_branch
          %529 = sbr.rel (%p527) target = $region32
        $region31: #{tpu_custom_call.1} parent=19 // pred_region
          %p530 = scmp.lt.s32.totalorder %s25, 1
          %s531 = scalar_select %p530, %s25, 1
          %s532 = smul.addr %s531, 4
          %s533 = smul.addr %s532, 4
          %s534 = scalar_lea.vmem %s3, %s533
        $region32: #{tpu_custom_call.1} parent=19 // pred_fallthru
          _
        // Predicated region
        $region33: #{tpu_custom_call.1} parent=19 // pred_check
          %p535 = pneg %p144
        $region34: #{tpu_custom_call.1} parent=19 // pred_check_branch
          %537 = sbr.rel (%p535) target = $region36
        $region35: #{tpu_custom_call.1} parent=19 // pred_region
          %p538 = scmp.lt.s32.totalorder %s25, 1
          %s539 = scalar_select %p538, %s25, 1
          %s540 = scalar_lea.vmem %s4, %s539
        $region36: #{tpu_custom_call.1} parent=19 // pred_fallthru
          _
        // Predicated region
        $region37: #{tpu_custom_call.1} parent=19 // pred_check
          %p541 = pneg %p170
        $region38: #{tpu_custom_call.1} parent=19 // pred_check_branch
          %543 = sbr.rel (%p541) target = $region40
        $region39: #{tpu_custom_call.1} parent=19 // pred_region
          %p544 = scmp.lt.s32.totalorder %s25, 1
          %s545 = scalar_select %p544, %s25, 1
          %s546 = smul.addr %s545, 4
          %s547 = smul.addr %s546, 4
          %s548 = scalar_lea.vmem %s5, %s547
        $region40: #{tpu_custom_call.1} parent=19 // pred_fallthru
          _
        // Predicated region
        $region41: #{tpu_custom_call.1} parent=19 // pred_check
          %p549 = pneg %p196
        $region42: #{tpu_custom_call.1} parent=19 // pred_check_branch
          %551 = sbr.rel (%p549) target = $region44
        $region43: #{tpu_custom_call.1} parent=19 // pred_region
          %p552 = scmp.lt.s32.totalorder %s25, 1
          %s553 = scalar_select %p552, %s25, 1
          %s554 = scalar_lea.vmem %s6, %s553
        $region44: #{tpu_custom_call.1} parent=19 // pred_fallthru
          _
        // Predicated region
        $region45: #{tpu_custom_call.1} parent=19 // pred_check
          %p555 = pneg %p222
        $region46: #{tpu_custom_call.1} parent=19 // pred_check_branch
          %557 = sbr.rel (%p555) target = $region48
        $region47: #{tpu_custom_call.1} parent=19 // pred_region
          %p558 = scmp.lt.s32.totalorder %s25, 1
          %s559 = scalar_select %p558, %s25, 1
          %s560 = smul.addr %s559, 4
          %s561 = smul.addr %s560, 4
          %s562 = scalar_lea.vmem %s7, %s561
        $region48: #{tpu_custom_call.1} parent=19 // pred_fallthru
          _
        // Predicated region
        $region49: #{tpu_custom_call.1} parent=19 // pred_check
          %p563 = pneg %p248
        $region50: #{tpu_custom_call.1} parent=19 // pred_check_branch
          %565 = sbr.rel (%p563) target = $region52
        $region51: #{tpu_custom_call.1} parent=19 // pred_region
          %p566 = scmp.lt.s32.totalorder %s25, 1
          %s567 = scalar_select %p566, %s25, 1
          %s568 = scalar_lea.vmem %s8, %s567
        $region52: #{tpu_custom_call.1} parent=19 // pred_fallthru
          _
        // Predicated region
        $region53: #{tpu_custom_call.1} parent=19 // pred_check
          %p569 = pneg %p274
        $region54: #{tpu_custom_call.1} parent=19 // pred_check_branch
          %571 = sbr.rel (%p569) target = $region56
        $region55: #{tpu_custom_call.1} parent=19 // pred_region
          %p572 = scmp.lt.s32.totalorder %s25, 1
          %s573 = scalar_select %p572, %s25, 1
          %s574 = scalar_lea.vmem %s9, %s573
        $region56: #{tpu_custom_call.1} parent=19 // pred_fallthru
          _
        // Predicated region
        $region57: #{tpu_custom_call.1} parent=19 // pred_check
          %p575 = pneg %p300
        $region58: #{tpu_custom_call.1} parent=19 // pred_check_branch
          %577 = sbr.rel (%p575) target = $region60
        $region59: #{tpu_custom_call.1} parent=19 // pred_region
          %p578 = scmp.lt.s32.totalorder %s25, 1
          %s579 = scalar_select %p578, %s25, 1
          %s580 = scalar_lea.vmem %s10, %s579
        $region60: #{tpu_custom_call.1} parent=19 // pred_fallthru
          _
        // Predicated region
        $region61: #{tpu_custom_call.1} parent=19 // pred_check
          %p581 = pneg %p326
        $region62: #{tpu_custom_call.1} parent=19 // pred_check_branch
          %583 = sbr.rel (%p581) target = $region64
        $region63: #{tpu_custom_call.1} parent=19 // pred_region
          %p584 = scmp.lt.s32.totalorder %s25, 1
          %s585 = scalar_select %p584, %s25, 1
          %s586 = smul.addr %s585, 4
          %s587 = smul.addr %s586, 4
          %s588 = scalar_lea.vmem %s11, %s587
        $region64: #{tpu_custom_call.1} parent=19 // pred_fallthru
          _
        // Predicated region
        $region65: #{tpu_custom_call.1} parent=19 // pred_check
          %p589 = pneg %p352
        $region66: #{tpu_custom_call.1} parent=19 // pred_check_branch
          %591 = sbr.rel (%p589) target = $region68
        $region67: #{tpu_custom_call.1} parent=19 // pred_region
          %p592 = scmp.lt.s32.totalorder %s25, 1
          %s593 = scalar_select %p592, %s25, 1
          %s594 = scalar_lea.vmem %s12, %s593
        $region68: #{tpu_custom_call.1} parent=19 // pred_fallthru
          _
        // Predicated region
        $region69: #{tpu_custom_call.1} parent=19 // pred_check
          %p595 = pneg %p378
        $region70: #{tpu_custom_call.1} parent=19 // pred_check_branch
          %597 = sbr.rel (%p595) target = $region72
        $region71: #{tpu_custom_call.1} parent=19 // pred_region
          %p598 = scmp.lt.s32.totalorder %s25, 1
          %s599 = scalar_select %p598, %s25, 1
          %s600 = smul.addr %s599, 16
          %s601 = smul.addr %s600, 4
          %s602 = scalar_lea.vmem %s13, %s601
        $region72: #{tpu_custom_call.1} parent=19 // pred_fallthru
          _
        // Predicated region
        $region73: #{tpu_custom_call.1} parent=19 // pred_check
          %p603 = pneg %p404
        $region74: #{tpu_custom_call.1} parent=19 // pred_check_branch
          %605 = sbr.rel (%p603) target = $region76
        $region75: #{tpu_custom_call.1} parent=19 // pred_region
          %p606 = scmp.lt.s32.totalorder %s25, 1
          %s607 = scalar_select %p606, %s25, 1
          %s608 = scalar_lea.vmem %s14, %s607
        $region76: #{tpu_custom_call.1} parent=19 // pred_fallthru
          _
        // Predicated region
        $region77: #{tpu_custom_call.1} parent=19 // pred_check
          %p609 = pneg %p430
        $region78: #{tpu_custom_call.1} parent=19 // pred_check_branch
          %611 = sbr.rel (%p609) target = $region80
        $region79: #{tpu_custom_call.1} parent=19 // pred_region
          %p612 = scmp.lt.s32.totalorder %s25, 1
          %s613 = scalar_select %p612, %s25, 1
          %s614 = scalar_lea.vmem %s15, %s613
        $region80: #{tpu_custom_call.1} parent=19 // pred_fallthru
          _
        // Predicated region
        $region81: #{tpu_custom_call.1} parent=19 // pred_check
          %p615 = pneg %p456
        $region82: #{tpu_custom_call.1} parent=19 // pred_check_branch
          %617 = sbr.rel (%p615) target = $region84
        $region83: #{tpu_custom_call.1} parent=19 // pred_region
          %p618 = scmp.lt.s32.totalorder %s25, 1
          %s619 = scalar_select %p618, %s25, 1
          %s620 = scalar_lea.vmem %s16, %s619
        $region84: #{tpu_custom_call.1} parent=19 // pred_fallthru
          _
      $region20: #{tpu_custom_call.1} parent=5 // pred_fallthru
        _
      %p621 = scmp.le.s32.totalorder 1, %s25
      %p622 = scmp.lt.s32.totalorder %s25, 3
      %p623 = pnand %p621, %p622
      %p624 = pneg %p623
      // Predicated region
      $region85: #{tpu_custom_call.1} parent=5 // pred_check
        _
      $region86: #{tpu_custom_call.1} parent=5 // pred_check_branch
        %626 = sbr.rel (%p623) target = $region88
      $region87: #{tpu_custom_call.1} parent=5 // pred_region
        %s627 = ssub.s32 %s25, 1
        // Predicated region
        $region89: #{tpu_custom_call.1} parent=87 // pred_check
          %p628 = pneg %p46
        $region90: #{tpu_custom_call.1} parent=87 // pred_check_branch
          %630 = sbr.rel (%p628) target = $region92
        $region91: #{tpu_custom_call.1} parent=87 // pred_region
          %631 = dma.done [#allocation4], 128
        $region92: #{tpu_custom_call.1} parent=87 // pred_fallthru
          _
        %p632 = pneg %p46
        %p633 = pneg %p43
        %p634 = scmp.lt.s32.totalorder %s30, 1
        %s635 = scalar_select %p634, %s30, 1
        %s636 = smul.addr %s635, 4
        %s637 = smul.addr %s636, 4
        %s638 = scalar_lea.vmem %s1, %s637
        %p639 = pneg %p72
        %p640 = pneg %p69
        %p641 = scmp.lt.s32.totalorder %s30, 1
        %s642 = scalar_select %p641, %s30, 1
        %s643 = scalar_lea.vmem %s2, %s642
        %p644 = pneg %p98
        %p645 = pneg %p95
        %p646 = scmp.lt.s32.totalorder %s30, 1
        %s647 = scalar_select %p646, %s30, 1
        %s648 = smul.addr %s647, 4
        %s649 = smul.addr %s648, 4
        %s650 = scalar_lea.vmem %s3, %s649
        %p651 = pneg %p124
        %p652 = pneg %p121
        %p653 = scmp.lt.s32.totalorder %s30, 1
        %s654 = scalar_select %p653, %s30, 1
        %s655 = scalar_lea.vmem %s4, %s654
        %p656 = pneg %p150
        %p657 = pneg %p147
        %p658 = scmp.lt.s32.totalorder %s30, 1
        %s659 = scalar_select %p658, %s30, 1
        %s660 = smul.addr %s659, 4
        %s661 = smul.addr %s660, 4
        %s662 = scalar_lea.vmem %s5, %s661
        %p663 = pneg %p176
        %p664 = pneg %p173
        %p665 = scmp.lt.s32.totalorder %s30, 1
        %s666 = scalar_select %p665, %s30, 1
        %s667 = scalar_lea.vmem %s6, %s666
        %p668 = pneg %p202
        %p669 = pneg %p199
        %p670 = scmp.lt.s32.totalorder %s30, 1
        %s671 = scalar_select %p670, %s30, 1
        %s672 = smul.addr %s671, 4
        %s673 = smul.addr %s672, 4
        %s674 = scalar_lea.vmem %s7, %s673
        %p675 = pneg %p228
        %p676 = pneg %p225
        %p677 = scmp.lt.s32.totalorder %s30, 1
        %s678 = scalar_select %p677, %s30, 1
        %s679 = scalar_lea.vmem %s8, %s678
        %p680 = pneg %p254
        %p681 = pneg %p251
        %p682 = scmp.lt.s32.totalorder %s30, 1
        %s683 = scalar_select %p682, %s30, 1
        %s684 = scalar_lea.vmem %s9, %s683
        %p685 = pneg %p280
        %p686 = pneg %p277
        %p687 = scmp.lt.s32.totalorder %s30, 1
        %s688 = scalar_select %p687, %s30, 1
        %s689 = scalar_lea.vmem %s10, %s688
        %p690 = pneg %p306
        %p691 = pneg %p303
        %p692 = scmp.lt.s32.totalorder %s30, 1
        %s693 = scalar_select %p692, %s30, 1
        %s694 = smul.addr %s693, 4
        %s695 = smul.addr %s694, 4
        %s696 = scalar_lea.vmem %s11, %s695
        %p697 = pneg %p332
        %p698 = pneg %p329
        %p699 = scmp.lt.s32.totalorder %s30, 1
        %s700 = scalar_select %p699, %s30, 1
        %s701 = scalar_lea.vmem %s12, %s700
        %p702 = pneg %p358
        %p703 = pneg %p355
        %p704 = scmp.lt.s32.totalorder %s30, 1
        %s705 = scalar_select %p704, %s30, 1
        %s706 = smul.addr %s705, 16
        %s707 = smul.addr %s706, 4
        %s708 = scalar_lea.vmem %s13, %s707
        %p709 = pneg %p384
        %p710 = pneg %p381
        %p711 = scmp.lt.s32.totalorder %s30, 1
        %s712 = scalar_select %p711, %s30, 1
        %s713 = scalar_lea.vmem %s14, %s712
        %p714 = pneg %p410
        %p715 = pneg %p407
        %p716 = scmp.lt.s32.totalorder %s30, 1
        %s717 = scalar_select %p716, %s30, 1
        %s718 = scalar_lea.vmem %s15, %s717
        %p719 = pneg %p436
        %p720 = pneg %p433
        %p721 = scmp.lt.s32.totalorder %s30, 1
        %s722 = scalar_select %p721, %s30, 1
        %s723 = scalar_lea.vmem %s16, %s722
        %p724 = pneg %p462
        %p725 = pneg %p459
        %p726 = pneg %p483
        %p727 = pneg %p480
        %p728 = scmp.lt.s32.totalorder %s30, 1
        %s729 = scalar_select %p728, %s30, 1
        %s730 = smul.addr %s729, 4
        %s731 = smul.addr %s730, 4
        %s732 = scalar_lea.vmem %s1, %s731
        %p733 = scmp.lt.s32.totalorder %s30, 1
        %s734 = scalar_select %p733, %s30, 1
        %s735 = scalar_lea.vmem %s2, %s734
        %p736 = scmp.lt.s32.totalorder %s30, 1
        %s737 = scalar_select %p736, %s30, 1
        %s738 = smul.addr %s737, 4
        %s739 = smul.addr %s738, 4
        %s740 = scalar_lea.vmem %s3, %s739
        %p741 = scmp.lt.s32.totalorder %s30, 1
        %s742 = scalar_select %p741, %s30, 1
        %s743 = scalar_lea.vmem %s4, %s742
        %p744 = scmp.lt.s32.totalorder %s30, 1
        %s745 = scalar_select %p744, %s30, 1
        %s746 = smul.addr %s745, 4
        %s747 = smul.addr %s746, 4
        %s748 = scalar_lea.vmem %s5, %s747
        %p749 = scmp.lt.s32.totalorder %s30, 1
        %s750 = scalar_select %p749, %s30, 1
        %s751 = scalar_lea.vmem %s6, %s750
        %p752 = scmp.lt.s32.totalorder %s30, 1
        %s753 = scalar_select %p752, %s30, 1
        %s754 = smul.addr %s753, 4
        %s755 = smul.addr %s754, 4
        %s756 = scalar_lea.vmem %s7, %s755
        %p757 = scmp.lt.s32.totalorder %s30, 1
        %s758 = scalar_select %p757, %s30, 1
        %s759 = scalar_lea.vmem %s8, %s758
        %p760 = scmp.lt.s32.totalorder %s30, 1
        %s761 = scalar_select %p760, %s30, 1
        %s762 = scalar_lea.vmem %s9, %s761
        %p763 = scmp.lt.s32.totalorder %s30, 1
        %s764 = scalar_select %p763, %s30, 1
        %s765 = scalar_lea.vmem %s10, %s764
        %p766 = scmp.lt.s32.totalorder %s30, 1
        %s767 = scalar_select %p766, %s30, 1
        %s768 = smul.addr %s767, 4
        %s769 = smul.addr %s768, 4
        %s770 = scalar_lea.vmem %s11, %s769
        %p771 = scmp.lt.s32.totalorder %s30, 1
        %s772 = scalar_select %p771, %s30, 1
        %s773 = scalar_lea.vmem %s12, %s772
        %p774 = scmp.lt.s32.totalorder %s30, 1
        %s775 = scalar_select %p774, %s30, 1
        %s776 = smul.addr %s775, 16
        %s777 = smul.addr %s776, 4
        %s778 = scalar_lea.vmem %s13, %s777
        %p779 = scmp.lt.s32.totalorder %s30, 1
        %s780 = scalar_select %p779, %s30, 1
        %s781 = scalar_lea.vmem %s14, %s780
        %p782 = scmp.lt.s32.totalorder %s30, 1
        %s783 = scalar_select %p782, %s30, 1
        %s784 = scalar_lea.vmem %s15, %s783
        %p785 = scmp.lt.s32.totalorder %s30, 1
        %s786 = scalar_select %p785, %s30, 1
        %s787 = scalar_lea.vmem %s16, %s786
        %p789 = scmp.eq.s32.totalorder %s30, 0
        // Predicated region
        $region93: #{tpu_custom_call.1} parent=87 // pred_check
          %p790 = pneg %p789
        $region94: #{tpu_custom_call.1} parent=87 // pred_check_branch
          %792 = sbr.rel (%p790) target = $region96
        $region95: #{tpu_custom_call.1} parent=87 // pred_region
          %v793 = vld [vmem:[#allocation3] sm:$0xff]
          %vm794 = vcmask 261120
          %795 = vst.msk [vmem:[#allocation2] sm:$0xff] %vm794, %v793
        $region96: #{tpu_custom_call.1} parent=87 // pred_fallthru
          _
        %v796 = vld [vmem:[#allocation2] sm:$0xff]
        %v797 = vpack.c.bf16 %v796, %v796
        %v798 = vld [vmem:[%s732] sm:$0xf]
        %v799 = vld [vmem:[%s732 + $0x4] sm:$0xf]
        %v800 = vld [vmem:[%s732 + $0x8] sm:$0xf]
        %v801 = vld [vmem:[%s732 + $0xc] sm:$0xf]
        %v802 = vld [vmem:[%s735] sm:$0x1]
        %v804 = vlaneseq
        %v805 = vshrl.u32 %v804, 7
        %v806 = vsub.s32 0, %v805
        %v807 = vrot.slane %v802, %v806
        %v813 = vunpack.c.l.b16 %v798
        %v814 = vunpack.c.l.b16 %v799
        %v815 = vunpack.c.l.b16 %v800
        %v816 = vunpack.c.l.b16 %v801
        %v817 = vpack.c.b16 %v814, %v813
        %v818 = vpack.c.b16 %v816, %v815
        %vm821 = vcmask 261120
        %v823 = vsel %vm821, %v797, 0
        %825 = vmatprep.subr.bf16.mxu0 0
        %826 = vmatpush1.bf16.msra.mxu0 %v817
        %827 = vmatprep.subr.bf16.mxu0 0
        %828 = vmatpush1.bf16.msra.mxu0 %v818
        %829 = vmatprep.subr.bf16.mxu0 0
        %830 = vmatpush1.bf16.msra.mxu0 0
        %831 = vmatprep.subr.bf16.mxu0 0
        %832 = vmatpush1.bf16.msra.mxu0 0
        %833 = vmatprep.subr.bf16.mxu0 0
        %834 = vmatpush1.bf16.msra.mxu0 0
        %835 = vmatprep.subr.bf16.mxu0 0
        %836 = vmatpush1.bf16.msra.mxu0 0
        %837 = vmatprep.subr.bf16.mxu0 0
        %838 = vmatpush1.bf16.msra.mxu0 0
        %839 = vmatprep.subr.bf16.mxu0 0
        %840 = vmatpush1.bf16.msra.mxu0 0
        %841 = vmatprep.subr.bf16.mxu0 0
        %842 = vmatpush1.bf16.msra.mxu0 0
        %843 = vmatprep.subr.bf16.mxu0 0
        %844 = vmatpush1.bf16.msra.mxu0 0
        %845 = vmatprep.subr.bf16.mxu0 0
        %846 = vmatpush1.bf16.msra.mxu0 0
        %847 = vmatprep.subr.bf16.mxu0 0
        %848 = vmatpush1.bf16.msra.mxu0 0
        %849 = vmatprep.subr.bf16.mxu0 0
        %850 = vmatpush1.bf16.msra.mxu0 0
        %851 = vmatprep.subr.bf16.mxu0 0
        %852 = vmatpush1.bf16.msra.mxu0 0
        %853 = vmatprep.subr.bf16.mxu0 0
        %854 = vmatpush1.bf16.msra.mxu0 0
        %855 = vmatprep.subr.bf16.mxu0 0
        %856 = vmatpush1.bf16.msra.mxu0 0
        %857 = vmatprep.mubr.bf16.mxu0 0
        %858 = vmatmul.mubr.bf16.gmra.mrb[0].mxu0 %v823
        %v859 = vpop.f32.mrb[0].mxu0
        %v860 = vadd.f32 %v807, %v859
        %v861 = vpop.f32.mrb[0].mxu0
        %v862 = vpop.f32.mrb[0].mxu0
        %v863 = vpop.f32.mrb[0].mxu0
        %864 = vdwg.mxu0
        %v865 = vld [vmem:[%s740] sm:$0xf]
        %v866 = vld [vmem:[%s740 + $0x4] sm:$0xf]
        %v867 = vld [vmem:[%s740 + $0x8] sm:$0xf]
        %v868 = vld [vmem:[%s740 + $0xc] sm:$0xf]
        %v869 = vld [vmem:[%s743] sm:$0x1]
        %v871 = vlaneseq
        %v872 = vshrl.u32 %v871, 7
        %v873 = vsub.s32 0, %v872
        %v874 = vrot.slane %v869, %v873
        %v880 = vunpack.c.l.b16 %v865
        %v881 = vunpack.c.l.b16 %v866
        %v882 = vunpack.c.l.b16 %v867
        %v883 = vunpack.c.l.b16 %v868
        %v884 = vpack.c.b16 %v881, %v880
        %v885 = vpack.c.b16 %v883, %v882
        %888 = vmatprep.subr.bf16.mxu0 0
        %889 = vmatpush1.bf16.msra.mxu0 %v884
        %890 = vmatprep.subr.bf16.mxu0 0
        %891 = vmatpush1.bf16.msra.mxu0 %v885
        %892 = vmatprep.subr.bf16.mxu0 0
        %893 = vmatpush1.bf16.msra.mxu0 0
        %894 = vmatprep.subr.bf16.mxu0 0
        %895 = vmatpush1.bf16.msra.mxu0 0
        %896 = vmatprep.subr.bf16.mxu0 0
        %897 = vmatpush1.bf16.msra.mxu0 0
        %898 = vmatprep.subr.bf16.mxu0 0
        %899 = vmatpush1.bf16.msra.mxu0 0
        %900 = vmatprep.subr.bf16.mxu0 0
        %901 = vmatpush1.bf16.msra.mxu0 0
        %902 = vmatprep.subr.bf16.mxu0 0
        %903 = vmatpush1.bf16.msra.mxu0 0
        %904 = vmatprep.subr.bf16.mxu0 0
        %905 = vmatpush1.bf16.msra.mxu0 0
        %906 = vmatprep.subr.bf16.mxu0 0
        %907 = vmatpush1.bf16.msra.mxu0 0
        %908 = vmatprep.subr.bf16.mxu0 0
        %909 = vmatpush1.bf16.msra.mxu0 0
        %910 = vmatprep.subr.bf16.mxu0 0
        %911 = vmatpush1.bf16.msra.mxu0 0
        %912 = vmatprep.subr.bf16.mxu0 0
        %913 = vmatpush1.bf16.msra.mxu0 0
        %914 = vmatprep.subr.bf16.mxu0 0
        %915 = vmatpush1.bf16.msra.mxu0 0
        %916 = vmatprep.subr.bf16.mxu0 0
        %917 = vmatpush1.bf16.msra.mxu0 0
        %918 = vmatprep.subr.bf16.mxu0 0
        %919 = vmatpush1.bf16.msra.mxu0 0
        %920 = vmatprep.mubr.bf16.mxu0 0
        %921 = vmatmul.mubr.bf16.gmra.mrb[0].mxu0 %v823
        %v922 = vpop.f32.mrb[0].mxu0
        %v923 = vadd.f32 %v874, %v922
        %v924 = vpop.f32.mrb[0].mxu0
        %v925 = vpop.f32.mrb[0].mxu0
        %v926 = vpop.f32.mrb[0].mxu0
        %927 = vdwg.mxu0
        %v928 = vld [vmem:[%s748] sm:$0xf]
        %v929 = vld [vmem:[%s748 + $0x4] sm:$0xf]
        %v930 = vld [vmem:[%s748 + $0x8] sm:$0xf]
        %v931 = vld [vmem:[%s748 + $0xc] sm:$0xf]
        %v932 = vld [vmem:[%s751] sm:$0x1]
        %v934 = vlaneseq
        %v935 = vshrl.u32 %v934, 7
        %v936 = vsub.s32 0, %v935
        %v937 = vrot.slane %v932, %v936
        %v943 = vunpack.c.l.b16 %v928
        %v944 = vunpack.c.l.b16 %v929
        %v945 = vunpack.c.l.b16 %v930
        %v946 = vunpack.c.l.b16 %v931
        %v947 = vpack.c.b16 %v944, %v943
        %v948 = vpack.c.b16 %v946, %v945
        %951 = vmatprep.subr.bf16.mxu0 0
        %952 = vmatpush1.bf16.msra.mxu0 %v947
        %953 = vmatprep.subr.bf16.mxu0 0
        %954 = vmatpush1.bf16.msra.mxu0 %v948
        %955 = vmatprep.subr.bf16.mxu0 0
        %956 = vmatpush1.bf16.msra.mxu0 0
        %957 = vmatprep.subr.bf16.mxu0 0
        %958 = vmatpush1.bf16.msra.mxu0 0
        %959 = vmatprep.subr.bf16.mxu0 0
        %960 = vmatpush1.bf16.msra.mxu0 0
        %961 = vmatprep.subr.bf16.mxu0 0
        %962 = vmatpush1.bf16.msra.mxu0 0
        %963 = vmatprep.subr.bf16.mxu0 0
        %964 = vmatpush1.bf16.msra.mxu0 0
        %965 = vmatprep.subr.bf16.mxu0 0
        %966 = vmatpush1.bf16.msra.mxu0 0
        %967 = vmatprep.subr.bf16.mxu0 0
        %968 = vmatpush1.bf16.msra.mxu0 0
        %969 = vmatprep.subr.bf16.mxu0 0
        %970 = vmatpush1.bf16.msra.mxu0 0
        %971 = vmatprep.subr.bf16.mxu0 0
        %972 = vmatpush1.bf16.msra.mxu0 0
        %973 = vmatprep.subr.bf16.mxu0 0
        %974 = vmatpush1.bf16.msra.mxu0 0
        %975 = vmatprep.subr.bf16.mxu0 0
        %976 = vmatpush1.bf16.msra.mxu0 0
        %977 = vmatprep.subr.bf16.mxu0 0
        %978 = vmatpush1.bf16.msra.mxu0 0
        %979 = vmatprep.subr.bf16.mxu0 0
        %980 = vmatpush1.bf16.msra.mxu0 0
        %981 = vmatprep.subr.bf16.mxu0 0
        %982 = vmatpush1.bf16.msra.mxu0 0
        %983 = vmatprep.mubr.bf16.mxu0 0
        %984 = vmatmul.mubr.bf16.gmra.mrb[0].mxu0 %v823
        %v985 = vpop.f32.mrb[0].mxu0
        %v986 = vadd.f32 %v937, %v985
        %v987 = vpop.f32.mrb[0].mxu0
        %v988 = vpop.f32.mrb[0].mxu0
        %v989 = vpop.f32.mrb[0].mxu0
        %990 = vdwg.mxu0
        %v991 = vmul.f32 %v860, 0.35355338
        %993 = vrot.lane.b32.xlu0 %v991, 120
        %v994 = vpop.permute.xlu0 %993
        %996 = vrot.lane.b32.xlu0 %v991, 112
        %v997 = vpop.permute.xlu0 %996
        %999 = vrot.lane.b32.xlu0 %v991, 104
        %v1000 = vpop.permute.xlu0 %999
        %v1002 = vcombine.low %v991, %v997
        %v1003 = vcombine.high %v991, %v997
        %v1005 = vunpack.c.l.s4 1983009808
        %v1006 = vunpack.c.0.s8 %v1005
        %v1007 = vlaneseq
        %v1008 = vshrl.u32 %v1007, 7
        %v1009 = vsub.s32 %v1006, %v1008
        %v1010 = vrot.slane %v1002, %v1009
        %v1012 = vunpack.c.l.s4 1983009808
        %v1013 = vunpack.c.0.s8 %v1012
        %v1014 = vlaneseq
        %v1015 = vshrl.u32 %v1014, 7
        %v1016 = vsub.s32 %v1013, %v1015
        %v1017 = vrot.slane %v1003, %v1016
        %v1018 = vcombine.low %v994, %v1000
        %v1019 = vcombine.high %v994, %v1000
        %v1021 = vunpack.c.l.s4 1983009808
        %v1022 = vunpack.c.0.s8 %v1021
        %v1023 = vlaneseq
        %v1024 = vshrl.u32 %v1023, 7
        %v1025 = vsub.s32 %v1022, %v1024
        %v1026 = vrot.slane %v1018, %v1025
        %v1028 = vunpack.c.l.s4 1983009808
        %v1029 = vunpack.c.0.s8 %v1028
        %v1030 = vlaneseq
        %v1031 = vshrl.u32 %v1030, 7
        %v1032 = vsub.s32 %v1029, %v1031
        %v1033 = vrot.slane %v1019, %v1032
        %v1034 = vcombine.low %v1010, %v1026
        %v1035 = vcombine.high %v1010, %v1026
        %v1037 = vunpack.c.l.s4 1934713408
        %v1038 = vunpack.c.0.s8 %v1037
        %v1039 = vlaneseq
        %v1040 = vshrl.u32 %v1039, 7
        %v1041 = vsub.s32 %v1038, %v1040
        %v1042 = vrot.slane %v1034, %v1041
        %v1044 = vunpack.c.l.s4 1934713408
        %v1045 = vunpack.c.0.s8 %v1044
        %v1046 = vlaneseq
        %v1047 = vshrl.u32 %v1046, 7
        %v1048 = vsub.s32 %v1045, %v1047
        %v1049 = vrot.slane %v1035, %v1048
        %v1050 = vcombine.low %v1017, %v1033
        %v1051 = vcombine.high %v1017, %v1033
        %v1053 = vunpack.c.l.s4 1934713408
        %v1054 = vunpack.c.0.s8 %v1053
        %v1055 = vlaneseq
        %v1056 = vshrl.u32 %v1055, 7
        %v1057 = vsub.s32 %v1054, %v1056
        %v1058 = vrot.slane %v1050, %v1057
        %v1060 = vunpack.c.l.s4 1934713408
        %v1061 = vunpack.c.0.s8 %v1060
        %v1062 = vlaneseq
        %v1063 = vshrl.u32 %v1062, 7
        %v1064 = vsub.s32 %v1061, %v1063
        %v1065 = vrot.slane %v1051, %v1064
        %v1066 = vcombine.high %v1042, 0.0
        %v1067 = vcombine.high %v1049, 0.0
        %v1068 = vcombine.high %v1058, 0.0
        %v1069 = vcombine.high %v1065, 0.0
        %v1070 = vcombine.low %v1042, %v1049
        %v1072 = vunpack.c.l.s4 1983009808
        %v1073 = vunpack.c.0.s8 %v1072
        %v1074 = vlaneseq
        %v1075 = vshrl.u32 %v1074, 7
        %v1076 = vsub.s32 %v1073, %v1075
        %v1077 = vrot.slane %v1070, %v1076
        %v1078 = vcombine.low %v1066, %v1067
        %v1080 = vunpack.c.l.s4 1983009808
        %v1081 = vunpack.c.0.s8 %v1080
        %v1082 = vlaneseq
        %v1083 = vshrl.u32 %v1082, 7
        %v1084 = vsub.s32 %v1081, %v1083
        %v1085 = vrot.slane %v1078, %v1084
        %v1086 = vcombine.low %v1058, %v1065
        %v1088 = vunpack.c.l.s4 1983009808
        %v1089 = vunpack.c.0.s8 %v1088
        %v1090 = vlaneseq
        %v1091 = vshrl.u32 %v1090, 7
        %v1092 = vsub.s32 %v1089, %v1091
        %v1093 = vrot.slane %v1086, %v1092
        %v1094 = vcombine.low %v1068, %v1069
        %v1096 = vunpack.c.l.s4 1983009808
        %v1097 = vunpack.c.0.s8 %v1096
        %v1098 = vlaneseq
        %v1099 = vshrl.u32 %v1098, 7
        %v1100 = vsub.s32 %v1097, %v1099
        %v1101 = vrot.slane %v1094, %v1100
        %v1102 = vcombine.low %v1077, %v1085
        %v1103 = vcombine.high %v1077, %v1085
        %v1105 = vunpack.c.l.s4 1934713408
        %v1106 = vunpack.c.0.s8 %v1105
        %v1107 = vlaneseq
        %v1108 = vshrl.u32 %v1107, 7
        %v1109 = vsub.s32 %v1106, %v1108
        %v1110 = vrot.slane %v1102, %v1109
        %v1112 = vunpack.c.l.s4 1934713408
        %v1113 = vunpack.c.0.s8 %v1112
        %v1114 = vlaneseq
        %v1115 = vshrl.u32 %v1114, 7
        %v1116 = vsub.s32 %v1113, %v1115
        %v1117 = vrot.slane %v1103, %v1116
        %v1118 = vcombine.low %v1093, %v1101
        %v1119 = vcombine.high %v1093, %v1101
        %v1121 = vunpack.c.l.s4 1934713408
        %v1122 = vunpack.c.0.s8 %v1121
        %v1123 = vlaneseq
        %v1124 = vshrl.u32 %v1123, 7
        %v1125 = vsub.s32 %v1122, %v1124
        %v1126 = vrot.slane %v1118, %v1125
        %v1128 = vunpack.c.l.s4 1934713408
        %v1129 = vunpack.c.0.s8 %v1128
        %v1130 = vlaneseq
        %v1131 = vshrl.u32 %v1130, 7
        %v1132 = vsub.s32 %v1129, %v1131
        %v1133 = vrot.slane %v1119, %v1132
        %v1134 = vcombine.low %v1110, %v1126
        %v1135 = vcombine.high %v1110, %v1126
        %v1136 = vcombine.low %v1117, %v1133
        %v1137 = vcombine.high %v1117, %v1133
        %1139 = vrot.lane.b32.xlu0 %v923, 120
        %v1140 = vpop.permute.xlu0 %1139
        %1142 = vrot.lane.b32.xlu0 %v923, 112
        %v1143 = vpop.permute.xlu0 %1142
        %1145 = vrot.lane.b32.xlu0 %v923, 104
        %v1146 = vpop.permute.xlu0 %1145
        %v1148 = vcombine.low %v923, %v1143
        %v1149 = vcombine.high %v923, %v1143
        %v1151 = vunpack.c.l.s4 1983009808
        %v1152 = vunpack.c.0.s8 %v1151
        %v1153 = vlaneseq
        %v1154 = vshrl.u32 %v1153, 7
        %v1155 = vsub.s32 %v1152, %v1154
        %v1156 = vrot.slane %v1148, %v1155
        %v1158 = vunpack.c.l.s4 1983009808
        %v1159 = vunpack.c.0.s8 %v1158
        %v1160 = vlaneseq
        %v1161 = vshrl.u32 %v1160, 7
        %v1162 = vsub.s32 %v1159, %v1161
        %v1163 = vrot.slane %v1149, %v1162
        %v1164 = vcombine.low %v1140, %v1146
        %v1165 = vcombine.high %v1140, %v1146
        %v1167 = vunpack.c.l.s4 1983009808
        %v1168 = vunpack.c.0.s8 %v1167
        %v1169 = vlaneseq
        %v1170 = vshrl.u32 %v1169, 7
        %v1171 = vsub.s32 %v1168, %v1170
        %v1172 = vrot.slane %v1164, %v1171
        %v1174 = vunpack.c.l.s4 1983009808
        %v1175 = vunpack.c.0.s8 %v1174
        %v1176 = vlaneseq
        %v1177 = vshrl.u32 %v1176, 7
        %v1178 = vsub.s32 %v1175, %v1177
        %v1179 = vrot.slane %v1165, %v1178
        %v1180 = vcombine.low %v1156, %v1172
        %v1181 = vcombine.high %v1156, %v1172
        %v1183 = vunpack.c.l.s4 1934713408
        %v1184 = vunpack.c.0.s8 %v1183
        %v1185 = vlaneseq
        %v1186 = vshrl.u32 %v1185, 7
        %v1187 = vsub.s32 %v1184, %v1186
        %v1188 = vrot.slane %v1180, %v1187
        %v1190 = vunpack.c.l.s4 1934713408
        %v1191 = vunpack.c.0.s8 %v1190
        %v1192 = vlaneseq
        %v1193 = vshrl.u32 %v1192, 7
        %v1194 = vsub.s32 %v1191, %v1193
        %v1195 = vrot.slane %v1181, %v1194
        %v1196 = vcombine.low %v1163, %v1179
        %v1197 = vcombine.high %v1163, %v1179
        %v1199 = vunpack.c.l.s4 1934713408
        %v1200 = vunpack.c.0.s8 %v1199
        %v1201 = vlaneseq
        %v1202 = vshrl.u32 %v1201, 7
        %v1203 = vsub.s32 %v1200, %v1202
        %v1204 = vrot.slane %v1196, %v1203
        %v1206 = vunpack.c.l.s4 1934713408
        %v1207 = vunpack.c.0.s8 %v1206
        %v1208 = vlaneseq
        %v1209 = vshrl.u32 %v1208, 7
        %v1210 = vsub.s32 %v1207, %v1209
        %v1211 = vrot.slane %v1197, %v1210
        %v1212 = vcombine.high %v1188, 0.0
        %v1213 = vcombine.high %v1195, 0.0
        %v1214 = vcombine.high %v1204, 0.0
        %v1215 = vcombine.high %v1211, 0.0
        %v1216 = vcombine.low %v1188, %v1195
        %v1218 = vunpack.c.l.s4 1983009808
        %v1219 = vunpack.c.0.s8 %v1218
        %v1220 = vlaneseq
        %v1221 = vshrl.u32 %v1220, 7
        %v1222 = vsub.s32 %v1219, %v1221
        %v1223 = vrot.slane %v1216, %v1222
        %v1224 = vcombine.low %v1212, %v1213
        %v1226 = vunpack.c.l.s4 1983009808
        %v1227 = vunpack.c.0.s8 %v1226
        %v1228 = vlaneseq
        %v1229 = vshrl.u32 %v1228, 7
        %v1230 = vsub.s32 %v1227, %v1229
        %v1231 = vrot.slane %v1224, %v1230
        %v1232 = vcombine.low %v1204, %v1211
        %v1234 = vunpack.c.l.s4 1983009808
        %v1235 = vunpack.c.0.s8 %v1234
        %v1236 = vlaneseq
        %v1237 = vshrl.u32 %v1236, 7
        %v1238 = vsub.s32 %v1235, %v1237
        %v1239 = vrot.slane %v1232, %v1238
        %v1240 = vcombine.low %v1214, %v1215
        %v1242 = vunpack.c.l.s4 1983009808
        %v1243 = vunpack.c.0.s8 %v1242
        %v1244 = vlaneseq
        %v1245 = vshrl.u32 %v1244, 7
        %v1246 = vsub.s32 %v1243, %v1245
        %v1247 = vrot.slane %v1240, %v1246
        %v1248 = vcombine.low %v1223, %v1231
        %v1249 = vcombine.high %v1223, %v1231
        %v1251 = vunpack.c.l.s4 1934713408
        %v1252 = vunpack.c.0.s8 %v1251
        %v1253 = vlaneseq
        %v1254 = vshrl.u32 %v1253, 7
        %v1255 = vsub.s32 %v1252, %v1254
        %v1256 = vrot.slane %v1248, %v1255
        %v1258 = vunpack.c.l.s4 1934713408
        %v1259 = vunpack.c.0.s8 %v1258
        %v1260 = vlaneseq
        %v1261 = vshrl.u32 %v1260, 7
        %v1262 = vsub.s32 %v1259, %v1261
        %v1263 = vrot.slane %v1249, %v1262
        %v1264 = vcombine.low %v1239, %v1247
        %v1265 = vcombine.high %v1239, %v1247
        %v1267 = vunpack.c.l.s4 1934713408
        %v1268 = vunpack.c.0.s8 %v1267
        %v1269 = vlaneseq
        %v1270 = vshrl.u32 %v1269, 7
        %v1271 = vsub.s32 %v1268, %v1270
        %v1272 = vrot.slane %v1264, %v1271
        %v1274 = vunpack.c.l.s4 1934713408
        %v1275 = vunpack.c.0.s8 %v1274
        %v1276 = vlaneseq
        %v1277 = vshrl.u32 %v1276, 7
        %v1278 = vsub.s32 %v1275, %v1277
        %v1279 = vrot.slane %v1265, %v1278
        %v1280 = vcombine.low %v1256, %v1272
        %v1281 = vcombine.high %v1256, %v1272
        %v1282 = vcombine.low %v1263, %v1279
        %v1283 = vcombine.high %v1263, %v1279
        %1285 = vrot.lane.b32.xlu0 %v986, 120
        %v1286 = vpop.permute.xlu0 %1285
        %1288 = vrot.lane.b32.xlu0 %v986, 112
        %v1289 = vpop.permute.xlu0 %1288
        %1291 = vrot.lane.b32.xlu0 %v986, 104
        %v1292 = vpop.permute.xlu0 %1291
        %v1294 = vcombine.low %v986, %v1289
        %v1295 = vcombine.high %v986, %v1289
        %v1297 = vunpack.c.l.s4 1983009808
        %v1298 = vunpack.c.0.s8 %v1297
        %v1299 = vlaneseq
        %v1300 = vshrl.u32 %v1299, 7
        %v1301 = vsub.s32 %v1298, %v1300
        %v1302 = vrot.slane %v1294, %v1301
        %v1304 = vunpack.c.l.s4 1983009808
        %v1305 = vunpack.c.0.s8 %v1304
        %v1306 = vlaneseq
        %v1307 = vshrl.u32 %v1306, 7
        %v1308 = vsub.s32 %v1305, %v1307
        %v1309 = vrot.slane %v1295, %v1308
        %v1310 = vcombine.low %v1286, %v1292
        %v1311 = vcombine.high %v1286, %v1292
        %v1313 = vunpack.c.l.s4 1983009808
        %v1314 = vunpack.c.0.s8 %v1313
        %v1315 = vlaneseq
        %v1316 = vshrl.u32 %v1315, 7
        %v1317 = vsub.s32 %v1314, %v1316
        %v1318 = vrot.slane %v1310, %v1317
        %v1320 = vunpack.c.l.s4 1983009808
        %v1321 = vunpack.c.0.s8 %v1320
        %v1322 = vlaneseq
        %v1323 = vshrl.u32 %v1322, 7
        %v1324 = vsub.s32 %v1321, %v1323
        %v1325 = vrot.slane %v1311, %v1324
        %v1326 = vcombine.low %v1302, %v1318
        %v1327 = vcombine.high %v1302, %v1318
        %v1329 = vunpack.c.l.s4 1934713408
        %v1330 = vunpack.c.0.s8 %v1329
        %v1331 = vlaneseq
        %v1332 = vshrl.u32 %v1331, 7
        %v1333 = vsub.s32 %v1330, %v1332
        %v1334 = vrot.slane %v1326, %v1333
        %v1336 = vunpack.c.l.s4 1934713408
        %v1337 = vunpack.c.0.s8 %v1336
        %v1338 = vlaneseq
        %v1339 = vshrl.u32 %v1338, 7
        %v1340 = vsub.s32 %v1337, %v1339
        %v1341 = vrot.slane %v1327, %v1340
        %v1342 = vcombine.low %v1309, %v1325
        %v1343 = vcombine.high %v1309, %v1325
        %v1345 = vunpack.c.l.s4 1934713408
        %v1346 = vunpack.c.0.s8 %v1345
        %v1347 = vlaneseq
        %v1348 = vshrl.u32 %v1347, 7
        %v1349 = vsub.s32 %v1346, %v1348
        %v1350 = vrot.slane %v1342, %v1349
        %v1352 = vunpack.c.l.s4 1934713408
        %v1353 = vunpack.c.0.s8 %v1352
        %v1354 = vlaneseq
        %v1355 = vshrl.u32 %v1354, 7
        %v1356 = vsub.s32 %v1353, %v1355
        %v1357 = vrot.slane %v1343, %v1356
        %v1358 = vcombine.high %v1334, 0.0
        %v1359 = vcombine.high %v1341, 0.0
        %v1360 = vcombine.high %v1350, 0.0
        %v1361 = vcombine.high %v1357, 0.0
        %v1362 = vcombine.low %v1334, %v1341
        %v1364 = vunpack.c.l.s4 1983009808
        %v1365 = vunpack.c.0.s8 %v1364
        %v1366 = vlaneseq
        %v1367 = vshrl.u32 %v1366, 7
        %v1368 = vsub.s32 %v1365, %v1367
        %v1369 = vrot.slane %v1362, %v1368
        %v1370 = vcombine.low %v1358, %v1359
        %v1372 = vunpack.c.l.s4 1983009808
        %v1373 = vunpack.c.0.s8 %v1372
        %v1374 = vlaneseq
        %v1375 = vshrl.u32 %v1374, 7
        %v1376 = vsub.s32 %v1373, %v1375
        %v1377 = vrot.slane %v1370, %v1376
        %v1378 = vcombine.low %v1350, %v1357
        %v1380 = vunpack.c.l.s4 1983009808
        %v1381 = vunpack.c.0.s8 %v1380
        %v1382 = vlaneseq
        %v1383 = vshrl.u32 %v1382, 7
        %v1384 = vsub.s32 %v1381, %v1383
        %v1385 = vrot.slane %v1378, %v1384
        %v1386 = vcombine.low %v1360, %v1361
        %v1388 = vunpack.c.l.s4 1983009808
        %v1389 = vunpack.c.0.s8 %v1388
        %v1390 = vlaneseq
        %v1391 = vshrl.u32 %v1390, 7
        %v1392 = vsub.s32 %v1389, %v1391
        %v1393 = vrot.slane %v1386, %v1392
        %v1394 = vcombine.low %v1369, %v1377
        %v1395 = vcombine.high %v1369, %v1377
        %v1397 = vunpack.c.l.s4 1934713408
        %v1398 = vunpack.c.0.s8 %v1397
        %v1399 = vlaneseq
        %v1400 = vshrl.u32 %v1399, 7
        %v1401 = vsub.s32 %v1398, %v1400
        %v1402 = vrot.slane %v1394, %v1401
        %v1404 = vunpack.c.l.s4 1934713408
        %v1405 = vunpack.c.0.s8 %v1404
        %v1406 = vlaneseq
        %v1407 = vshrl.u32 %v1406, 7
        %v1408 = vsub.s32 %v1405, %v1407
        %v1409 = vrot.slane %v1395, %v1408
        %v1410 = vcombine.low %v1385, %v1393
        %v1411 = vcombine.high %v1385, %v1393
        %v1413 = vunpack.c.l.s4 1934713408
        %v1414 = vunpack.c.0.s8 %v1413
        %v1415 = vlaneseq
        %v1416 = vshrl.u32 %v1415, 7
        %v1417 = vsub.s32 %v1414, %v1416
        %v1418 = vrot.slane %v1410, %v1417
        %v1420 = vunpack.c.l.s4 1934713408
        %v1421 = vunpack.c.0.s8 %v1420
        %v1422 = vlaneseq
        %v1423 = vshrl.u32 %v1422, 7
        %v1424 = vsub.s32 %v1421, %v1423
        %v1425 = vrot.slane %v1411, %v1424
        %v1426 = vcombine.low %v1402, %v1418
        %v1427 = vcombine.high %v1402, %v1418
        %v1428 = vcombine.low %v1409, %v1425
        %v1429 = vcombine.high %v1409, %v1425
        %v1430 = vpack.c.bf16 %v1134, %v1134
        %v1431 = vpack.c.bf16 %v1135, %v1135
        %v1432 = vpack.c.bf16 %v1136, %v1136
        %v1433 = vpack.c.bf16 %v1137, %v1137
        %v1434 = vpack.c.bf16 %v1280, %v1280
        %v1435 = vpack.c.bf16 %v1281, %v1281
        %v1436 = vpack.c.bf16 %v1282, %v1282
        %v1437 = vpack.c.bf16 %v1283, %v1283
        %vm1438 = vcmask 64512
        %v1440 = vsel %vm1438, %v1430, 0
        %v1443 = vsel %vm1438, %v1434, 0
        %1445 = vmatprep.subr.bf16.mxu0 0
        %1446 = vmatpush1.bf16.xpose.msra.mxu0 %v1443
        %1447 = vmatprep.subr.bf16.mxu0 0
        %1448 = vmatpush1.bf16.xpose.msra.mxu0 0
        %1449 = vmatprep.subr.bf16.mxu0 0
        %1450 = vmatpush1.bf16.xpose.msra.mxu0 0
        %1451 = vmatprep.subr.bf16.mxu0 0
        %1452 = vmatpush1.bf16.xpose.msra.mxu0 0
        %1453 = vmatprep.subr.bf16.mxu0 0
        %1454 = vmatpush1.bf16.xpose.msra.mxu0 0
        %1455 = vmatprep.subr.bf16.mxu0 0
        %1456 = vmatpush1.bf16.xpose.msra.mxu0 0
        %1457 = vmatprep.subr.bf16.mxu0 0
        %1458 = vmatpush1.bf16.xpose.msra.mxu0 0
        %1459 = vmatprep.subr.bf16.mxu0 0
        %1460 = vmatpush1.bf16.xpose.msra.mxu0 0
        %1461 = vmatprep.subr.bf16.mxu0 0
        %1462 = vmatpush1.bf16.xpose.msra.mxu0 0
        %1463 = vmatprep.subr.bf16.mxu0 0
        %1464 = vmatpush1.bf16.xpose.msra.mxu0 0
        %1465 = vmatprep.subr.bf16.mxu0 0
        %1466 = vmatpush1.bf16.xpose.msra.mxu0 0
        %1467 = vmatprep.subr.bf16.mxu0 0
        %1468 = vmatpush1.bf16.xpose.msra.mxu0 0
        %1469 = vmatprep.subr.bf16.mxu0 0
        %1470 = vmatpush1.bf16.xpose.msra.mxu0 0
        %1471 = vmatprep.subr.bf16.mxu0 0
        %1472 = vmatpush1.bf16.xpose.msra.mxu0 0
        %1473 = vmatprep.subr.bf16.mxu0 0
        %1474 = vmatpush1.bf16.xpose.msra.mxu0 0
        %1475 = vmatprep.subr.bf16.mxu0 0
        %1476 = vmatpush1.bf16.xpose.msra.mxu0 0
        %1477 = vmatprep.mubr.bf16.mxu0 0
        %1478 = vmatmul.mubr.bf16.gmra.mrb[0].mxu0 %v1440
        %v1479 = vpop.f32.mrb[0].mxu0
        %v1480 = vadd.f32 0.0, %v1479
        %v1481 = vpop.f32.mrb[0].mxu0
        %v1482 = vpop.f32.mrb[0].mxu0
        %v1483 = vpop.f32.mrb[0].mxu0
        %1484 = vdwg.mxu0
        %v1486 = vsel %vm1438, %v1431, 0
        %v1489 = vsel %vm1438, %v1435, 0
        %1491 = vmatprep.subr.bf16.mxu0 0
        %1492 = vmatpush1.bf16.xpose.msra.mxu0 %v1489
        %1493 = vmatprep.subr.bf16.mxu0 0
        %1494 = vmatpush1.bf16.xpose.msra.mxu0 0
        %1495 = vmatprep.subr.bf16.mxu0 0
        %1496 = vmatpush1.bf16.xpose.msra.mxu0 0
        %1497 = vmatprep.subr.bf16.mxu0 0
        %1498 = vmatpush1.bf16.xpose.msra.mxu0 0
        %1499 = vmatprep.subr.bf16.mxu0 0
        %1500 = vmatpush1.bf16.xpose.msra.mxu0 0
        %1501 = vmatprep.subr.bf16.mxu0 0
        %1502 = vmatpush1.bf16.xpose.msra.mxu0 0
        %1503 = vmatprep.subr.bf16.mxu0 0
        %1504 = vmatpush1.bf16.xpose.msra.mxu0 0
        %1505 = vmatprep.subr.bf16.mxu0 0
        %1506 = vmatpush1.bf16.xpose.msra.mxu0 0
        %1507 = vmatprep.subr.bf16.mxu0 0
        %1508 = vmatpush1.bf16.xpose.msra.mxu0 0
        %1509 = vmatprep.subr.bf16.mxu0 0
        %1510 = vmatpush1.bf16.xpose.msra.mxu0 0
        %1511 = vmatprep.subr.bf16.mxu0 0
        %1512 = vmatpush1.bf16.xpose.msra.mxu0 0
        %1513 = vmatprep.subr.bf16.mxu0 0
        %1514 = vmatpush1.bf16.xpose.msra.mxu0 0
        %1515 = vmatprep.subr.bf16.mxu0 0
        %1516 = vmatpush1.bf16.xpose.msra.mxu0 0
        %1517 = vmatprep.subr.bf16.mxu0 0
        %1518 = vmatpush1.bf16.xpose.msra.mxu0 0
        %1519 = vmatprep.subr.bf16.mxu0 0
        %1520 = vmatpush1.bf16.xpose.msra.mxu0 0
        %1521 = vmatprep.subr.bf16.mxu0 0
        %1522 = vmatpush1.bf16.xpose.msra.mxu0 0
        %1523 = vmatprep.mubr.bf16.mxu0 0
        %1524 = vmatmul.mubr.bf16.gmra.mrb[0].mxu0 %v1486
        %v1525 = vpop.f32.mrb[0].mxu0
        %v1526 = vadd.f32 0.0, %v1525
        %v1527 = vpop.f32.mrb[0].mxu0
        %v1528 = vpop.f32.mrb[0].mxu0
        %v1529 = vpop.f32.mrb[0].mxu0
        %1530 = vdwg.mxu0
        %v1532 = vsel %vm1438, %v1432, 0
        %v1535 = vsel %vm1438, %v1436, 0
        %1537 = vmatprep.subr.bf16.mxu0 0
        %1538 = vmatpush1.bf16.xpose.msra.mxu0 %v1535
        %1539 = vmatprep.subr.bf16.mxu0 0
        %1540 = vmatpush1.bf16.xpose.msra.mxu0 0
        %1541 = vmatprep.subr.bf16.mxu0 0
        %1542 = vmatpush1.bf16.xpose.msra.mxu0 0
        %1543 = vmatprep.subr.bf16.mxu0 0
        %1544 = vmatpush1.bf16.xpose.msra.mxu0 0
        %1545 = vmatprep.subr.bf16.mxu0 0
        %1546 = vmatpush1.bf16.xpose.msra.mxu0 0
        %1547 = vmatprep.subr.bf16.mxu0 0
        %1548 = vmatpush1.bf16.xpose.msra.mxu0 0
        %1549 = vmatprep.subr.bf16.mxu0 0
        %1550 = vmatpush1.bf16.xpose.msra.mxu0 0
        %1551 = vmatprep.subr.bf16.mxu0 0
        %1552 = vmatpush1.bf16.xpose.msra.mxu0 0
        %1553 = vmatprep.subr.bf16.mxu0 0
        %1554 = vmatpush1.bf16.xpose.msra.mxu0 0
        %1555 = vmatprep.subr.bf16.mxu0 0
        %1556 = vmatpush1.bf16.xpose.msra.mxu0 0
        %1557 = vmatprep.subr.bf16.mxu0 0
        %1558 = vmatpush1.bf16.xpose.msra.mxu0 0
        %1559 = vmatprep.subr.bf16.mxu0 0
        %1560 = vmatpush1.bf16.xpose.msra.mxu0 0
        %1561 = vmatprep.subr.bf16.mxu0 0
        %1562 = vmatpush1.bf16.xpose.msra.mxu0 0
        %1563 = vmatprep.subr.bf16.mxu0 0
        %1564 = vmatpush1.bf16.xpose.msra.mxu0 0
        %1565 = vmatprep.subr.bf16.mxu0 0
        %1566 = vmatpush1.bf16.xpose.msra.mxu0 0
        %1567 = vmatprep.subr.bf16.mxu0 0
        %1568 = vmatpush1.bf16.xpose.msra.mxu0 0
        %1569 = vmatprep.mubr.bf16.mxu0 0
        %1570 = vmatmul.mubr.bf16.gmra.mrb[0].mxu0 %v1532
        %v1571 = vpop.f32.mrb[0].mxu0
        %v1572 = vadd.f32 0.0, %v1571
        %v1573 = vpop.f32.mrb[0].mxu0
        %v1574 = vpop.f32.mrb[0].mxu0
        %v1575 = vpop.f32.mrb[0].mxu0
        %1576 = vdwg.mxu0
        %v1578 = vsel %vm1438, %v1433, 0
        %v1581 = vsel %vm1438, %v1437, 0
        %1583 = vmatprep.subr.bf16.mxu0 0
        %1584 = vmatpush1.bf16.xpose.msra.mxu0 %v1581
        %1585 = vmatprep.subr.bf16.mxu0 0
        %1586 = vmatpush1.bf16.xpose.msra.mxu0 0
        %1587 = vmatprep.subr.bf16.mxu0 0
        %1588 = vmatpush1.bf16.xpose.msra.mxu0 0
        %1589 = vmatprep.subr.bf16.mxu0 0
        %1590 = vmatpush1.bf16.xpose.msra.mxu0 0
        %1591 = vmatprep.subr.bf16.mxu0 0
        %1592 = vmatpush1.bf16.xpose.msra.mxu0 0
        %1593 = vmatprep.subr.bf16.mxu0 0
        %1594 = vmatpush1.bf16.xpose.msra.mxu0 0
        %1595 = vmatprep.subr.bf16.mxu0 0
        %1596 = vmatpush1.bf16.xpose.msra.mxu0 0
        %1597 = vmatprep.subr.bf16.mxu0 0
        %1598 = vmatpush1.bf16.xpose.msra.mxu0 0
        %1599 = vmatprep.subr.bf16.mxu0 0
        %1600 = vmatpush1.bf16.xpose.msra.mxu0 0
        %1601 = vmatprep.subr.bf16.mxu0 0
        %1602 = vmatpush1.bf16.xpose.msra.mxu0 0
        %1603 = vmatprep.subr.bf16.mxu0 0
        %1604 = vmatpush1.bf16.xpose.msra.mxu0 0
        %1605 = vmatprep.subr.bf16.mxu0 0
        %1606 = vmatpush1.bf16.xpose.msra.mxu0 0
        %1607 = vmatprep.subr.bf16.mxu0 0
        %1608 = vmatpush1.bf16.xpose.msra.mxu0 0
        %1609 = vmatprep.subr.bf16.mxu0 0
        %1610 = vmatpush1.bf16.xpose.msra.mxu0 0
        %1611 = vmatprep.subr.bf16.mxu0 0
        %1612 = vmatpush1.bf16.xpose.msra.mxu0 0
        %1613 = vmatprep.subr.bf16.mxu0 0
        %1614 = vmatpush1.bf16.xpose.msra.mxu0 0
        %1615 = vmatprep.mubr.bf16.mxu0 0
        %1616 = vmatmul.mubr.bf16.gmra.mrb[0].mxu0 %v1578
        %v1617 = vpop.f32.mrb[0].mxu0
        %v1618 = vadd.f32 0.0, %v1617
        %v1619 = vpop.f32.mrb[0].mxu0
        %v1620 = vpop.f32.mrb[0].mxu0
        %v1621 = vpop.f32.mrb[0].mxu0
        %1622 = vdwg.mxu0
        %v1623 = vsel %vm1438, %v1480, -inf
        %1624 = vmax.xlane.f32.xlu0 %v1623
        %v1625 = vpop.xlane.xlu0 %1624
        %v1626 = vsel %vm1438, %v1526, -inf
        %1627 = vmax.xlane.f32.xlu0 %v1626
        %v1628 = vpop.xlane.xlu0 %1627
        %v1629 = vsel %vm1438, %v1572, -inf
        %1630 = vmax.xlane.f32.xlu0 %v1629
        %v1631 = vpop.xlane.xlu0 %1630
        %v1632 = vsel %vm1438, %v1618, -inf
        %1633 = vmax.xlane.f32.xlu0 %v1632
        %v1634 = vpop.xlane.xlu0 %1633
        %v1635 = vsub.f32 %v1480, %v1625
        %v1636 = vsub.f32 %v1526, %v1628
        %v1637 = vsub.f32 %v1572, %v1631
        %v1638 = vsub.f32 %v1618, %v1634
        %v1639 = vmul.f32 %v1635, 1.442695
        %v1640 = vpow.pop %v1639
        %v1641 = vmul.f32 %v1636, 1.442695
        %v1642 = vpow.pop %v1641
        %v1643 = vmul.f32 %v1637, 1.442695
        %v1644 = vpow.pop %v1643
        %v1645 = vmul.f32 %v1638, 1.442695
        %v1646 = vpow.pop %v1645
        %v1647 = vsel %vm1438, %v1640, 0.0
        %1648 = vadd.xlane.f32.xlu0 %v1647
        %v1649 = vpop.xlane.xlu0 %1648
        %v1650 = vsel %vm1438, %v1642, 0.0
        %1651 = vadd.xlane.f32.xlu0 %v1650
        %v1652 = vpop.xlane.xlu0 %1651
        %v1653 = vsel %vm1438, %v1644, 0.0
        %1654 = vadd.xlane.f32.xlu0 %v1653
        %v1655 = vpop.xlane.xlu0 %1654
        %v1656 = vsel %vm1438, %v1646, 0.0
        %1657 = vadd.xlane.f32.xlu0 %v1656
        %v1658 = vpop.xlane.xlu0 %1657
        %v1659 = vrcp.pop %v1649
        %v1660 = vrcp.pop %v1652
        %v1661 = vrcp.pop %v1655
        %v1662 = vrcp.pop %v1658
        %v1663 = vmul.f32 %v1640, %v1659
        %v1664 = vmul.f32 %v1642, %v1660
        %v1665 = vmul.f32 %v1644, %v1661
        %v1666 = vmul.f32 %v1646, %v1662
        %v1667 = vpack.c.bf16 %v1663, %v1663
        %v1668 = vpack.c.bf16 %v1664, %v1664
        %v1669 = vpack.c.bf16 %v1665, %v1665
        %v1670 = vpack.c.bf16 %v1666, %v1666
        %v1671 = vpack.c.bf16 %v1426, %v1426
        %v1672 = vpack.c.bf16 %v1427, %v1427
        %v1673 = vpack.c.bf16 %v1428, %v1428
        %v1674 = vpack.c.bf16 %v1429, %v1429
        %v1676 = vsel %vm1438, %v1667, 0
        %vm1678 = vcmask 1043456
        %v1680 = vsel %vm1678, %v1671, 0
        %1682 = vmatprep.subr.bf16.mxu0 0
        %1683 = vmatpush1.bf16.msra.mxu0 %v1680
        %1684 = vmatprep.subr.bf16.mxu0 0
        %1685 = vmatpush1.bf16.msra.mxu0 0
        %1686 = vmatprep.subr.bf16.mxu0 0
        %1687 = vmatpush1.bf16.msra.mxu0 0
        %1688 = vmatprep.subr.bf16.mxu0 0
        %1689 = vmatpush1.bf16.msra.mxu0 0
        %1690 = vmatprep.subr.bf16.mxu0 0
        %1691 = vmatpush1.bf16.msra.mxu0 0
        %1692 = vmatprep.subr.bf16.mxu0 0
        %1693 = vmatpush1.bf16.msra.mxu0 0
        %1694 = vmatprep.subr.bf16.mxu0 0
        %1695 = vmatpush1.bf16.msra.mxu0 0
        %1696 = vmatprep.subr.bf16.mxu0 0
        %1697 = vmatpush1.bf16.msra.mxu0 0
        %1698 = vmatprep.subr.bf16.mxu0 0
        %1699 = vmatpush1.bf16.msra.mxu0 0
        %1700 = vmatprep.subr.bf16.mxu0 0
        %1701 = vmatpush1.bf16.msra.mxu0 0
        %1702 = vmatprep.subr.bf16.mxu0 0
        %1703 = vmatpush1.bf16.msra.mxu0 0
        %1704 = vmatprep.subr.bf16.mxu0 0
        %1705 = vmatpush1.bf16.msra.mxu0 0
        %1706 = vmatprep.subr.bf16.mxu0 0
        %1707 = vmatpush1.bf16.msra.mxu0 0
        %1708 = vmatprep.subr.bf16.mxu0 0
        %1709 = vmatpush1.bf16.msra.mxu0 0
        %1710 = vmatprep.subr.bf16.mxu0 0
        %1711 = vmatpush1.bf16.msra.mxu0 0
        %1712 = vmatprep.subr.bf16.mxu0 0
        %1713 = vmatpush1.bf16.msra.mxu0 0
        %1714 = vmatprep.mubr.bf16.mxu0 0
        %1715 = vmatmul.mubr.bf16.gmra.mrb[0].mxu0 %v1676
        %v1716 = vpop.f32.mrb[0].mxu0
        %v1717 = vadd.f32 0.0, %v1716
        %v1718 = vpop.f32.mrb[0].mxu0
        %v1719 = vpop.f32.mrb[0].mxu0
        %v1720 = vpop.f32.mrb[0].mxu0
        %1721 = vdwg.mxu0
        %v1723 = vsel %vm1438, %v1668, 0
        %v1726 = vsel %vm1678, %v1672, 0
        %1728 = vmatprep.subr.bf16.mxu0 0
        %1729 = vmatpush1.bf16.msra.mxu0 %v1726
        %1730 = vmatprep.subr.bf16.mxu0 0
        %1731 = vmatpush1.bf16.msra.mxu0 0
        %1732 = vmatprep.subr.bf16.mxu0 0
        %1733 = vmatpush1.bf16.msra.mxu0 0
        %1734 = vmatprep.subr.bf16.mxu0 0
        %1735 = vmatpush1.bf16.msra.mxu0 0
        %1736 = vmatprep.subr.bf16.mxu0 0
        %1737 = vmatpush1.bf16.msra.mxu0 0
        %1738 = vmatprep.subr.bf16.mxu0 0
        %1739 = vmatpush1.bf16.msra.mxu0 0
        %1740 = vmatprep.subr.bf16.mxu0 0
        %1741 = vmatpush1.bf16.msra.mxu0 0
        %1742 = vmatprep.subr.bf16.mxu0 0
        %1743 = vmatpush1.bf16.msra.mxu0 0
        %1744 = vmatprep.subr.bf16.mxu0 0
        %1745 = vmatpush1.bf16.msra.mxu0 0
        %1746 = vmatprep.subr.bf16.mxu0 0
        %1747 = vmatpush1.bf16.msra.mxu0 0
        %1748 = vmatprep.subr.bf16.mxu0 0
        %1749 = vmatpush1.bf16.msra.mxu0 0
        %1750 = vmatprep.subr.bf16.mxu0 0
        %1751 = vmatpush1.bf16.msra.mxu0 0
        %1752 = vmatprep.subr.bf16.mxu0 0
        %1753 = vmatpush1.bf16.msra.mxu0 0
        %1754 = vmatprep.subr.bf16.mxu0 0
        %1755 = vmatpush1.bf16.msra.mxu0 0
        %1756 = vmatprep.subr.bf16.mxu0 0
        %1757 = vmatpush1.bf16.msra.mxu0 0
        %1758 = vmatprep.subr.bf16.mxu0 0
        %1759 = vmatpush1.bf16.msra.mxu0 0
        %1760 = vmatprep.mubr.bf16.mxu0 0
        %1761 = vmatmul.mubr.bf16.gmra.mrb[0].mxu0 %v1723
        %v1762 = vpop.f32.mrb[0].mxu0
        %v1763 = vadd.f32 0.0, %v1762
        %v1764 = vpop.f32.mrb[0].mxu0
        %v1765 = vpop.f32.mrb[0].mxu0
        %v1766 = vpop.f32.mrb[0].mxu0
        %1767 = vdwg.mxu0
        %v1769 = vsel %vm1438, %v1669, 0
        %v1772 = vsel %vm1678, %v1673, 0
        %1774 = vmatprep.subr.bf16.mxu0 0
        %1775 = vmatpush1.bf16.msra.mxu0 %v1772
        %1776 = vmatprep.subr.bf16.mxu0 0
        %1777 = vmatpush1.bf16.msra.mxu0 0
        %1778 = vmatprep.subr.bf16.mxu0 0
        %1779 = vmatpush1.bf16.msra.mxu0 0
        %1780 = vmatprep.subr.bf16.mxu0 0
        %1781 = vmatpush1.bf16.msra.mxu0 0
        %1782 = vmatprep.subr.bf16.mxu0 0
        %1783 = vmatpush1.bf16.msra.mxu0 0
        %1784 = vmatprep.subr.bf16.mxu0 0
        %1785 = vmatpush1.bf16.msra.mxu0 0
        %1786 = vmatprep.subr.bf16.mxu0 0
        %1787 = vmatpush1.bf16.msra.mxu0 0
        %1788 = vmatprep.subr.bf16.mxu0 0
        %1789 = vmatpush1.bf16.msra.mxu0 0
        %1790 = vmatprep.subr.bf16.mxu0 0
        %1791 = vmatpush1.bf16.msra.mxu0 0
        %1792 = vmatprep.subr.bf16.mxu0 0
        %1793 = vmatpush1.bf16.msra.mxu0 0
        %1794 = vmatprep.subr.bf16.mxu0 0
        %1795 = vmatpush1.bf16.msra.mxu0 0
        %1796 = vmatprep.subr.bf16.mxu0 0
        %1797 = vmatpush1.bf16.msra.mxu0 0
        %1798 = vmatprep.subr.bf16.mxu0 0
        %1799 = vmatpush1.bf16.msra.mxu0 0
        %1800 = vmatprep.subr.bf16.mxu0 0
        %1801 = vmatpush1.bf16.msra.mxu0 0
        %1802 = vmatprep.subr.bf16.mxu0 0
        %1803 = vmatpush1.bf16.msra.mxu0 0
        %1804 = vmatprep.subr.bf16.mxu0 0
        %1805 = vmatpush1.bf16.msra.mxu0 0
        %1806 = vmatprep.mubr.bf16.mxu0 0
        %1807 = vmatmul.mubr.bf16.gmra.mrb[0].mxu0 %v1769
        %v1808 = vpop.f32.mrb[0].mxu0
        %v1809 = vadd.f32 0.0, %v1808
        %v1810 = vpop.f32.mrb[0].mxu0
        %v1811 = vpop.f32.mrb[0].mxu0
        %v1812 = vpop.f32.mrb[0].mxu0
        %1813 = vdwg.mxu0
        %v1815 = vsel %vm1438, %v1670, 0
        %v1818 = vsel %vm1678, %v1674, 0
        %1820 = vmatprep.subr.bf16.mxu0 0
        %1821 = vmatpush1.bf16.msra.mxu0 %v1818
        %1822 = vmatprep.subr.bf16.mxu0 0
        %1823 = vmatpush1.bf16.msra.mxu0 0
        %1824 = vmatprep.subr.bf16.mxu0 0
        %1825 = vmatpush1.bf16.msra.mxu0 0
        %1826 = vmatprep.subr.bf16.mxu0 0
        %1827 = vmatpush1.bf16.msra.mxu0 0
        %1828 = vmatprep.subr.bf16.mxu0 0
        %1829 = vmatpush1.bf16.msra.mxu0 0
        %1830 = vmatprep.subr.bf16.mxu0 0
        %1831 = vmatpush1.bf16.msra.mxu0 0
        %1832 = vmatprep.subr.bf16.mxu0 0
        %1833 = vmatpush1.bf16.msra.mxu0 0
        %1834 = vmatprep.subr.bf16.mxu0 0
        %1835 = vmatpush1.bf16.msra.mxu0 0
        %1836 = vmatprep.subr.bf16.mxu0 0
        %1837 = vmatpush1.bf16.msra.mxu0 0
        %1838 = vmatprep.subr.bf16.mxu0 0
        %1839 = vmatpush1.bf16.msra.mxu0 0
        %1840 = vmatprep.subr.bf16.mxu0 0
        %1841 = vmatpush1.bf16.msra.mxu0 0
        %1842 = vmatprep.subr.bf16.mxu0 0
        %1843 = vmatpush1.bf16.msra.mxu0 0
        %1844 = vmatprep.subr.bf16.mxu0 0
        %1845 = vmatpush1.bf16.msra.mxu0 0
        %1846 = vmatprep.subr.bf16.mxu0 0
        %1847 = vmatpush1.bf16.msra.mxu0 0
        %1848 = vmatprep.subr.bf16.mxu0 0
        %1849 = vmatpush1.bf16.msra.mxu0 0
        %1850 = vmatprep.subr.bf16.mxu0 0
        %1851 = vmatpush1.bf16.msra.mxu0 0
        %1852 = vmatprep.mubr.bf16.mxu0 0
        %1853 = vmatmul.mubr.bf16.gmra.mrb[0].mxu0 %v1815
        %v1854 = vpop.f32.mrb[0].mxu0
        %v1855 = vadd.f32 0.0, %v1854
        %v1856 = vpop.f32.mrb[0].mxu0
        %v1857 = vpop.f32.mrb[0].mxu0
        %v1858 = vpop.f32.mrb[0].mxu0
        %1859 = vdwg.mxu0
        %v1860 = vcombine.low %v1717, %v1809
        %v1861 = vcombine.high %v1717, %v1809
        %v1863 = vunpack.c.l.s4 1983009808
        %v1864 = vunpack.c.0.s8 %v1863
        %v1865 = vlaneseq
        %v1866 = vshrl.u32 %v1865, 7
        %v1867 = vsub.s32 %v1864, %v1866
        %v1868 = vrot.slane %v1860, %v1867
        %v1870 = vunpack.c.l.s4 1983009808
        %v1871 = vunpack.c.0.s8 %v1870
        %v1872 = vlaneseq
        %v1873 = vshrl.u32 %v1872, 7
        %v1874 = vsub.s32 %v1871, %v1873
        %v1875 = vrot.slane %v1861, %v1874
        %v1876 = vcombine.low %v1763, %v1855
        %v1877 = vcombine.high %v1763, %v1855
        %v1879 = vunpack.c.l.s4 1983009808
        %v1880 = vunpack.c.0.s8 %v1879
        %v1881 = vlaneseq
        %v1882 = vshrl.u32 %v1881, 7
        %v1883 = vsub.s32 %v1880, %v1882
        %v1884 = vrot.slane %v1876, %v1883
        %v1886 = vunpack.c.l.s4 1983009808
        %v1887 = vunpack.c.0.s8 %v1886
        %v1888 = vlaneseq
        %v1889 = vshrl.u32 %v1888, 7
        %v1890 = vsub.s32 %v1887, %v1889
        %v1891 = vrot.slane %v1877, %v1890
        %v1892 = vcombine.low %v1868, %v1884
        %v1893 = vcombine.high %v1868, %v1884
        %v1895 = vunpack.c.l.s4 1934713408
        %v1896 = vunpack.c.0.s8 %v1895
        %v1897 = vlaneseq
        %v1898 = vshrl.u32 %v1897, 7
        %v1899 = vsub.s32 %v1896, %v1898
        %v1900 = vrot.slane %v1892, %v1899
        %v1902 = vunpack.c.l.s4 1934713408
        %v1903 = vunpack.c.0.s8 %v1902
        %v1904 = vlaneseq
        %v1905 = vshrl.u32 %v1904, 7
        %v1906 = vsub.s32 %v1903, %v1905
        %v1907 = vrot.slane %v1893, %v1906
        %v1908 = vcombine.low %v1875, %v1891
        %v1909 = vcombine.high %v1875, %v1891
        %v1911 = vunpack.c.l.s4 1934713408
        %v1912 = vunpack.c.0.s8 %v1911
        %v1913 = vlaneseq
        %v1914 = vshrl.u32 %v1913, 7
        %v1915 = vsub.s32 %v1912, %v1914
        %v1916 = vrot.slane %v1908, %v1915
        %v1918 = vunpack.c.l.s4 1934713408
        %v1919 = vunpack.c.0.s8 %v1918
        %v1920 = vlaneseq
        %v1921 = vshrl.u32 %v1920, 7
        %v1922 = vsub.s32 %v1919, %v1921
        %v1923 = vrot.slane %v1909, %v1922
        %v1924 = vcombine.high %v1900, 0.0
        %v1925 = vcombine.high %v1907, 0.0
        %v1926 = vcombine.high %v1916, 0.0
        %v1927 = vcombine.high %v1923, 0.0
        %v1928 = vcombine.low %v1900, %v1907
        %v1930 = vunpack.c.l.s4 1983009808
        %v1931 = vunpack.c.0.s8 %v1930
        %v1932 = vlaneseq
        %v1933 = vshrl.u32 %v1932, 7
        %v1934 = vsub.s32 %v1931, %v1933
        %v1935 = vrot.slane %v1928, %v1934
        %v1936 = vcombine.low %v1924, %v1925
        %v1938 = vunpack.c.l.s4 1983009808
        %v1939 = vunpack.c.0.s8 %v1938
        %v1940 = vlaneseq
        %v1941 = vshrl.u32 %v1940, 7
        %v1942 = vsub.s32 %v1939, %v1941
        %v1943 = vrot.slane %v1936, %v1942
        %v1944 = vcombine.low %v1916, %v1923
        %v1946 = vunpack.c.l.s4 1983009808
        %v1947 = vunpack.c.0.s8 %v1946
        %v1948 = vlaneseq
        %v1949 = vshrl.u32 %v1948, 7
        %v1950 = vsub.s32 %v1947, %v1949
        %v1951 = vrot.slane %v1944, %v1950
        %v1952 = vcombine.low %v1926, %v1927
        %v1954 = vunpack.c.l.s4 1983009808
        %v1955 = vunpack.c.0.s8 %v1954
        %v1956 = vlaneseq
        %v1957 = vshrl.u32 %v1956, 7
        %v1958 = vsub.s32 %v1955, %v1957
        %v1959 = vrot.slane %v1952, %v1958
        %v1960 = vcombine.low %v1935, %v1943
        %v1961 = vcombine.high %v1935, %v1943
        %v1963 = vunpack.c.l.s4 1934713408
        %v1964 = vunpack.c.0.s8 %v1963
        %v1965 = vlaneseq
        %v1966 = vshrl.u32 %v1965, 7
        %v1967 = vsub.s32 %v1964, %v1966
        %v1968 = vrot.slane %v1960, %v1967
        %v1970 = vunpack.c.l.s4 1934713408
        %v1971 = vunpack.c.0.s8 %v1970
        %v1972 = vlaneseq
        %v1973 = vshrl.u32 %v1972, 7
        %v1974 = vsub.s32 %v1971, %v1973
        %v1975 = vrot.slane %v1961, %v1974
        %v1976 = vcombine.low %v1951, %v1959
        %v1977 = vcombine.high %v1951, %v1959
        %v1979 = vunpack.c.l.s4 1934713408
        %v1980 = vunpack.c.0.s8 %v1979
        %v1981 = vlaneseq
        %v1982 = vshrl.u32 %v1981, 7
        %v1983 = vsub.s32 %v1980, %v1982
        %v1984 = vrot.slane %v1976, %v1983
        %v1986 = vunpack.c.l.s4 1934713408
        %v1987 = vunpack.c.0.s8 %v1986
        %v1988 = vlaneseq
        %v1989 = vshrl.u32 %v1988, 7
        %v1990 = vsub.s32 %v1987, %v1989
        %v1991 = vrot.slane %v1977, %v1990
        %v1992 = vcombine.low %v1968, %v1984
        %v1993 = vcombine.high %v1968, %v1984
        %v1994 = vcombine.low %v1975, %v1991
        %v1995 = vcombine.high %v1975, %v1991
        %1997 = vrot.lane.b32.xlu0 %v1993, 8
        %v1998 = vpop.permute.xlu0 %1997
        %2001 = vrot.lane.b32.xlu0 %v1994, 16
        %v2002 = vpop.permute.xlu0 %2001
        %2005 = vrot.lane.b32.xlu0 %v1995, 24
        %v2006 = vpop.permute.xlu0 %2005
        %v2008 = vsel %vm1438, %v1992, %v1998
        %vm2009 = vcmask 130048
        %v2010 = vsel %vm2009, %v2008, %v2002
        %vm2011 = vcmask 195584
        %v2012 = vsel %vm2011, %v2010, %v2006
        %v2013 = vpack.c.bf16 %v2012, %v2012
        %v2014 = vld [vmem:[%s756] sm:$0xf]
        %v2015 = vld [vmem:[%s756 + $0x4] sm:$0xf]
        %v2016 = vld [vmem:[%s756 + $0x8] sm:$0xf]
        %v2017 = vld [vmem:[%s756 + $0xc] sm:$0xf]
        %v2018 = vld [vmem:[%s759] sm:$0x1]
        %v2020 = vlaneseq
        %v2021 = vshrl.u32 %v2020, 7
        %v2022 = vsub.s32 0, %v2021
        %v2023 = vrot.slane %v2018, %v2022
        %v2029 = vunpack.c.l.b16 %v2014
        %v2030 = vunpack.c.l.b16 %v2015
        %v2031 = vunpack.c.l.b16 %v2016
        %v2032 = vunpack.c.l.b16 %v2017
        %v2033 = vpack.c.b16 %v2030, %v2029
        %v2034 = vpack.c.b16 %v2032, %v2031
        %v2038 = vsel %vm821, %v2013, 0
        %2040 = vmatprep.subr.bf16.mxu0 0
        %2041 = vmatpush1.bf16.msra.mxu0 %v2033
        %2042 = vmatprep.subr.bf16.mxu0 0
        %2043 = vmatpush1.bf16.msra.mxu0 %v2034
        %2044 = vmatprep.subr.bf16.mxu0 0
        %2045 = vmatpush1.bf16.msra.mxu0 0
        %2046 = vmatprep.subr.bf16.mxu0 0
        %2047 = vmatpush1.bf16.msra.mxu0 0
        %2048 = vmatprep.subr.bf16.mxu0 0
        %2049 = vmatpush1.bf16.msra.mxu0 0
        %2050 = vmatprep.subr.bf16.mxu0 0
        %2051 = vmatpush1.bf16.msra.mxu0 0
        %2052 = vmatprep.subr.bf16.mxu0 0
        %2053 = vmatpush1.bf16.msra.mxu0 0
        %2054 = vmatprep.subr.bf16.mxu0 0
        %2055 = vmatpush1.bf16.msra.mxu0 0
        %2056 = vmatprep.subr.bf16.mxu0 0
        %2057 = vmatpush1.bf16.msra.mxu0 0
        %2058 = vmatprep.subr.bf16.mxu0 0
        %2059 = vmatpush1.bf16.msra.mxu0 0
        %2060 = vmatprep.subr.bf16.mxu0 0
        %2061 = vmatpush1.bf16.msra.mxu0 0
        %2062 = vmatprep.subr.bf16.mxu0 0
        %2063 = vmatpush1.bf16.msra.mxu0 0
        %2064 = vmatprep.subr.bf16.mxu0 0
        %2065 = vmatpush1.bf16.msra.mxu0 0
        %2066 = vmatprep.subr.bf16.mxu0 0
        %2067 = vmatpush1.bf16.msra.mxu0 0
        %2068 = vmatprep.subr.bf16.mxu0 0
        %2069 = vmatpush1.bf16.msra.mxu0 0
        %2070 = vmatprep.subr.bf16.mxu0 0
        %2071 = vmatpush1.bf16.msra.mxu0 0
        %2072 = vmatprep.mubr.bf16.mxu0 0
        %2073 = vmatmul.mubr.bf16.gmra.mrb[0].mxu0 %v2038
        %v2074 = vpop.f32.mrb[0].mxu0
        %v2075 = vadd.f32 %v2023, %v2074
        %v2076 = vpop.f32.mrb[0].mxu0
        %v2077 = vpop.f32.mrb[0].mxu0
        %v2078 = vpop.f32.mrb[0].mxu0
        %2079 = vdwg.mxu0
        %v2080 = vadd.f32 %v796, %v2075
        %v2081 = vld [vmem:[%s762] sm:$0x1]
        %v2082 = vld [vmem:[%s765] sm:$0x1]
        %v2083 = vsel %vm821, %v2080, 0.0
        %2084 = vadd.xlane.f32.xlu0 %v2083
        %v2085 = vpop.xlane.xlu0 %2084
        %v2086 = vrcp.pop 32.0
        %v2087 = vmul.f32 %v2085, %v2086
        %v2088 = vsub.f32 %v2080, %v2087
        %v2089 = vmul.f32 %v2088, %v2088
        %v2090 = vsel %vm821, %v2089, 0.0
        %2091 = vadd.xlane.f32.xlu0 %v2090
        %v2092 = vpop.xlane.xlu0 %2091
        %v2093 = vmul.f32 %v2092, %v2086
        %v2094 = vadd.f32 %v2093, 1e-05
        %v2095 = vrsqrt.pop %v2094
        %v2096 = vmul.f32 %v2088, %v2095
        %v2098 = vlaneseq
        %v2099 = vshrl.u32 %v2098, 7
        %v2100 = vsub.s32 0, %v2099
        %v2101 = vrot.slane %v2081, %v2100
        %v2103 = vmul.f32 %v2096, %v2101
        %v2105 = vlaneseq
        %v2106 = vshrl.u32 %v2105, 7
        %v2107 = vsub.s32 0, %v2106
        %v2108 = vrot.slane %v2082, %v2107
        %v2110 = vadd.f32 %v2103, %v2108
        %v2111 = vpack.c.bf16 %v2110, %v2110
        %v2112 = vld [vmem:[%s770] sm:$0xf]
        %v2113 = vld [vmem:[%s770 + $0x4] sm:$0xf]
        %v2114 = vld [vmem:[%s770 + $0x8] sm:$0xf]
        %v2115 = vld [vmem:[%s770 + $0xc] sm:$0xf]
        %v2116 = vld [vmem:[%s773] sm:$0x1]
        %v2118 = vlaneseq
        %v2119 = vshrl.u32 %v2118, 7
        %v2120 = vsub.s32 0, %v2119
        %v2121 = vrot.slane %v2116, %v2120
        %v2127 = vunpack.c.l.b16 %v2112
        %v2128 = vunpack.c.l.b16 %v2113
        %v2129 = vunpack.c.l.b16 %v2114
        %v2130 = vunpack.c.l.b16 %v2115
        %v2131 = vpack.c.b16 %v2128, %v2127
        %v2132 = vpack.c.b16 %v2130, %v2129
        %v2136 = vsel %vm821, %v2111, 0
        %2138 = vmatprep.subr.bf16.mxu0 0
        %2139 = vmatpush1.bf16.msra.mxu0 %v2131
        %2140 = vmatprep.subr.bf16.mxu0 0
        %2141 = vmatpush1.bf16.msra.mxu0 %v2132
        %2142 = vmatprep.subr.bf16.mxu0 0
        %2143 = vmatpush1.bf16.msra.mxu0 0
        %2144 = vmatprep.subr.bf16.mxu0 0
        %2145 = vmatpush1.bf16.msra.mxu0 0
        %2146 = vmatprep.subr.bf16.mxu0 0
        %2147 = vmatpush1.bf16.msra.mxu0 0
        %2148 = vmatprep.subr.bf16.mxu0 0
        %2149 = vmatpush1.bf16.msra.mxu0 0
        %2150 = vmatprep.subr.bf16.mxu0 0
        %2151 = vmatpush1.bf16.msra.mxu0 0
        %2152 = vmatprep.subr.bf16.mxu0 0
        %2153 = vmatpush1.bf16.msra.mxu0 0
        %2154 = vmatprep.subr.bf16.mxu0 0
        %2155 = vmatpush1.bf16.msra.mxu0 0
        %2156 = vmatprep.subr.bf16.mxu0 0
        %2157 = vmatpush1.bf16.msra.mxu0 0
        %2158 = vmatprep.subr.bf16.mxu0 0
        %2159 = vmatpush1.bf16.msra.mxu0 0
        %2160 = vmatprep.subr.bf16.mxu0 0
        %2161 = vmatpush1.bf16.msra.mxu0 0
        %2162 = vmatprep.subr.bf16.mxu0 0
        %2163 = vmatpush1.bf16.msra.mxu0 0
        %2164 = vmatprep.subr.bf16.mxu0 0
        %2165 = vmatpush1.bf16.msra.mxu0 0
        %2166 = vmatprep.subr.bf16.mxu0 0
        %2167 = vmatpush1.bf16.msra.mxu0 0
        %2168 = vmatprep.subr.bf16.mxu0 0
        %2169 = vmatpush1.bf16.msra.mxu0 0
        %2170 = vmatprep.mubr.bf16.mxu0 0
        %2171 = vmatmul.mubr.bf16.gmra.mrb[0].mxu0 %v2136
        %v2172 = vpop.f32.mrb[0].mxu0
        %v2173 = vadd.f32 %v2121, %v2172
        %v2174 = vpop.f32.mrb[0].mxu0
        %v2175 = vpop.f32.mrb[0].mxu0
        %v2176 = vpop.f32.mrb[0].mxu0
        %2177 = vdwg.mxu0
        %v2178 = vmax.f32 %v2173, 0.0
        %v2179 = vpack.c.bf16 %v2178, %v2178
        %v2180 = vld [vmem:[%s778] sm:$0xf]
        %v2181 = vld [vmem:[%s778 + $0x4] sm:$0xf]
        %v2182 = vld [vmem:[%s778 + $0x8] sm:$0xf]
        %v2183 = vld [vmem:[%s778 + $0xc] sm:$0xf]
        %v2184 = vld [vmem:[%s778 + $0x10] sm:$0xf]
        %v2185 = vld [vmem:[%s778 + $0x14] sm:$0xf]
        %v2186 = vld [vmem:[%s778 + $0x18] sm:$0xf]
        %v2187 = vld [vmem:[%s778 + $0x1c] sm:$0xf]
        %v2188 = vld [vmem:[%s778 + $0x20] sm:$0xf]
        %v2189 = vld [vmem:[%s778 + $0x24] sm:$0xf]
        %v2190 = vld [vmem:[%s778 + $0x28] sm:$0xf]
        %v2191 = vld [vmem:[%s778 + $0x2c] sm:$0xf]
        %v2192 = vld [vmem:[%s778 + $0x30] sm:$0xf]
        %v2193 = vld [vmem:[%s778 + $0x34] sm:$0xf]
        %v2194 = vld [vmem:[%s778 + $0x38] sm:$0xf]
        %v2195 = vld [vmem:[%s778 + $0x3c] sm:$0xf]
        %v2196 = vld [vmem:[%s781] sm:$0x1]
        %v2198 = vlaneseq
        %v2199 = vshrl.u32 %v2198, 7
        %v2200 = vsub.s32 0, %v2199
        %v2201 = vrot.slane %v2196, %v2200
        %v2219 = vunpack.c.l.b16 %v2180
        %v2220 = vunpack.c.l.b16 %v2181
        %v2221 = vunpack.c.l.b16 %v2182
        %v2222 = vunpack.c.l.b16 %v2183
        %v2223 = vunpack.c.l.b16 %v2184
        %v2224 = vunpack.c.l.b16 %v2185
        %v2225 = vunpack.c.l.b16 %v2186
        %v2226 = vunpack.c.l.b16 %v2187
        %v2227 = vunpack.c.l.b16 %v2188
        %v2228 = vunpack.c.l.b16 %v2189
        %v2229 = vunpack.c.l.b16 %v2190
        %v2230 = vunpack.c.l.b16 %v2191
        %v2231 = vunpack.c.l.b16 %v2192
        %v2232 = vunpack.c.l.b16 %v2193
        %v2233 = vunpack.c.l.b16 %v2194
        %v2234 = vunpack.c.l.b16 %v2195
        %v2235 = vpack.c.b16 %v2220, %v2219
        %v2236 = vpack.c.b16 %v2222, %v2221
        %v2237 = vpack.c.b16 %v2224, %v2223
        %v2238 = vpack.c.b16 %v2226, %v2225
        %v2239 = vpack.c.b16 %v2228, %v2227
        %v2240 = vpack.c.b16 %v2230, %v2229
        %v2241 = vpack.c.b16 %v2232, %v2231
        %v2242 = vpack.c.b16 %v2234, %v2233
        %2251 = vmatprep.subr.bf16.mxu0 0
        %2252 = vmatpush1.bf16.msra.mxu0 %v2235
        %2253 = vmatprep.subr.bf16.mxu0 0
        %2254 = vmatpush1.bf16.msra.mxu0 %v2236
        %2255 = vmatprep.subr.bf16.mxu0 0
        %2256 = vmatpush1.bf16.msra.mxu0 %v2237
        %2257 = vmatprep.subr.bf16.mxu0 0
        %2258 = vmatpush1.bf16.msra.mxu0 %v2238
        %2259 = vmatprep.subr.bf16.mxu0 0
        %2260 = vmatpush1.bf16.msra.mxu0 %v2239
        %2261 = vmatprep.subr.bf16.mxu0 0
        %2262 = vmatpush1.bf16.msra.mxu0 %v2240
        %2263 = vmatprep.subr.bf16.mxu0 0
        %2264 = vmatpush1.bf16.msra.mxu0 %v2241
        %2265 = vmatprep.subr.bf16.mxu0 0
        %2266 = vmatpush1.bf16.msra.mxu0 %v2242
        %2267 = vmatprep.subr.bf16.mxu0 0
        %2268 = vmatpush1.bf16.msra.mxu0 0
        %2269 = vmatprep.subr.bf16.mxu0 0
        %2270 = vmatpush1.bf16.msra.mxu0 0
        %2271 = vmatprep.subr.bf16.mxu0 0
        %2272 = vmatpush1.bf16.msra.mxu0 0
        %2273 = vmatprep.subr.bf16.mxu0 0
        %2274 = vmatpush1.bf16.msra.mxu0 0
        %2275 = vmatprep.subr.bf16.mxu0 0
        %2276 = vmatpush1.bf16.msra.mxu0 0
        %2277 = vmatprep.subr.bf16.mxu0 0
        %2278 = vmatpush1.bf16.msra.mxu0 0
        %2279 = vmatprep.subr.bf16.mxu0 0
        %2280 = vmatpush1.bf16.msra.mxu0 0
        %2281 = vmatprep.subr.bf16.mxu0 0
        %2282 = vmatpush1.bf16.msra.mxu0 0
        %2283 = vmatprep.mubr.bf16.mxu0 0
        %2284 = vmatmul.mubr.bf16.gmra.mrb[0].mxu0 %v2179
        %v2285 = vpop.f32.mrb[0].mxu0
        %v2286 = vadd.f32 %v2201, %v2285
        %v2287 = vpop.f32.mrb[0].mxu0
        %v2288 = vpop.f32.mrb[0].mxu0
        %v2289 = vpop.f32.mrb[0].mxu0
        %2290 = vdwg.mxu0
        %v2291 = vadd.f32 %v2110, %v2286
        %v2292 = vld [vmem:[%s784] sm:$0x1]
        %v2293 = vld [vmem:[%s787] sm:$0x1]
        %v2294 = vsel %vm821, %v2291, 0.0
        %2295 = vadd.xlane.f32.xlu0 %v2294
        %v2296 = vpop.xlane.xlu0 %2295
        %v2297 = vmul.f32 %v2296, %v2086
        %v2298 = vsub.f32 %v2291, %v2297
        %v2299 = vmul.f32 %v2298, %v2298
        %v2300 = vsel %vm821, %v2299, 0.0
        %2301 = vadd.xlane.f32.xlu0 %v2300
        %v2302 = vpop.xlane.xlu0 %2301
        %v2303 = vmul.f32 %v2302, %v2086
        %v2304 = vadd.f32 %v2303, 1e-05
        %v2305 = vrsqrt.pop %v2304
        %v2306 = vmul.f32 %v2298, %v2305
        %v2308 = vlaneseq
        %v2309 = vshrl.u32 %v2308, 7
        %v2310 = vsub.s32 0, %v2309
        %v2311 = vrot.slane %v2292, %v2310
        %v2313 = vmul.f32 %v2306, %v2311
        %v2315 = vlaneseq
        %v2316 = vshrl.u32 %v2315, 7
        %v2317 = vsub.s32 0, %v2316
        %v2318 = vrot.slane %v2293, %v2317
        %v2320 = vadd.f32 %v2313, %v2318
        %2321 = vst.msk [vmem:[#allocation2] sm:$0xff] %vm821, %v2320
        %2322 = vst.msk [vmem:[#allocation6] sm:$0xff] %vm821, %v2320
        // Predicated region
        $region97: #{tpu_custom_call.1} parent=87 // pred_check
          %p2323 = pneg %p480
        $region98: #{tpu_custom_call.1} parent=87 // pred_check_branch
          %2325 = sbr.rel (%p2323) target = $region100
        $region99: #{tpu_custom_call.1} parent=87 // pred_region
          %s2327 = ssub.s32 128, 128
          %2328 = vsyncadd [#allocation5], %s2327
          %s2330 = sshll.u32 [#allocation6], 4
          %s2331 = int_to_ptr.vmem [resolvable:$true] %s2330
          %2333 = dma.vmem_to_hbm [thread:$0]  %s2331, 128, %s17, [#allocation5]
        $region100: #{tpu_custom_call.1} parent=87 // pred_fallthru
          _
        // Predicated region
        $region101: #{tpu_custom_call.1} parent=87 // pred_check
          %p2334 = pneg %p480
        $region102: #{tpu_custom_call.1} parent=87 // pred_check_branch
          %2336 = sbr.rel (%p2334) target = $region104
        $region103: #{tpu_custom_call.1} parent=87 // pred_region
          %2337 = dma.done [#allocation5], 128
        $region104: #{tpu_custom_call.1} parent=87 // pred_fallthru
          _
      $region88: #{tpu_custom_call.1} parent=5 // pred_fallthru
        _
      %p2338 = scmp.le.s32.totalorder 2, %s25
      // Predicated region
      $region105: #{tpu_custom_call.1} parent=5 // pred_check
        %p2339 = pneg %p2338
      $region106: #{tpu_custom_call.1} parent=5 // pred_check_branch
        %2341 = sbr.rel (%p2339) target = $region108
      $region107: #{tpu_custom_call.1} parent=5 // pred_region
        %s2342 = ssub.s32 %s25, 2
      $region108: #{tpu_custom_call.1} parent=5 // pred_fallthru
        _
    $region6: #{tpu_custom_call.1} parent=1 // loop_footer
      %s29 = sadd.s32 1, %s25
    $region7: #{tpu_custom_call.1} parent=1 // loop_footer_branch
      %24 = sbr.rel target = $region3
    $region8: #{tpu_custom_call.1} parent=1 // loop_exit
      _
    %2343 = vsyncpa [#allocation4], 1
    %s2344 = scalar_lea.sflag [#allocation4], 1
    %2345 = vsyncpa %s2344, 1
    %2346 = vsyncpa [#allocation5], 1
    %s2347 = scalar_lea.sflag [#allocation5], 1
    %2348 = vsyncpa %s2347, 1

</llo_original>
